<compile_context>
chip_gen: v6e
topology: v6e:2x2x1
jax: 0.10.0
libtpu: 0.0.40
codegen_flags: <defaults>
</compile_context>

<pallas_src>
import functools
import numpy as np

import jax
import jax.numpy as jnp
from jax import lax
from jax.experimental import pallas as pl
from jax.experimental.pallas import tpu as pltpu

# ---------------- model dimensions (small, deterministic synthetic setup) ----------
N_KP = 8          # num_kps           (rows of attn_mem)
IN_DIM = 32       # input_dim         (attn_mem feature dim, LSTM input dim)
HIDDEN = 32       # n_hidden of the pointer net / LSTM
MLP_HIDDEN = 80   # MLP(in_dim=1, hidden_dim=80, to_score=True)
MLP_PAD = 128     # zero-padded to a full 128-lane vreg
N_HOP = 1         # ptr_net._n_hop  (single-layer LSTM => query shape [1, HIDDEN])
BETA = 0.5
NUM_OUTPUTS = 3

NEG_BIG = -1e18        # filter_by_cond sentinel (matches the PyTorch reference)
NEG_SENTINEL = -1e30   # finite "minus infinity" for the masked max (no inf/NaN risk)


def _sigmoid(x):
    # tanh formulation: mathematically identical, runs on the EUP instead of a VALU divide.
    return 0.5 * (jnp.tanh(0.5 * x) + 1.0)


def _dot_nt(a, b):
    # a [m,k] @ b[n,k]^T -> [m,n]  (contract last dims, no explicit transpose)
    return lax.dot_general(a, b, (((1,), (1,)), ((), ())),
                           preferred_element_type=jnp.float32)


# ------------------------------ fused extraction kernel ----------------------------
def _make_fused_kernel(num_outputs, n_hop, beta):
    def kernel(attn_mem_ref, h0_ref, c0_ref, x0_ref, sel_row0_ref, sel_col0_ref,
               lstm_w_ref, lstm_b_ref, wm_ref, wq_ref, hop_v_ref, attn_v_ref,
               mlp_w1_ref, mlp_b1_ref, mlp_w2_ref, mlp_b2_ref,
               scores_ref,
               h_scr, c_scr, x_scr, sel_row_scr, sel_col_scr):
        step = pl.program_id(0)
        N = attn_mem_ref.shape[0]
        D = x_scr.shape[-1]
        H = h_scr.shape[-1]

        @pl.when(step == 0)
        def _init():
            h_scr[...] = h0_ref[...]
            c_scr[...] = c0_ref[...]
            x_scr[...] = x0_ref[...]
            sel_row_scr[...] = sel_row0_ref[...]
            sel_col_scr[...] = sel_col0_ref[...]
            scores_ref[...] = jnp.zeros_like(scores_ref)

        # ---- state carried across grid steps (read pre-update values) ----
        x = x_scr[...]               # [1, D]  last extracted kp encoding (LSTM input)
        h = h_scr[...]               # [1, H]
        c = c_scr[...]               # [1, H]
        sel_row = sel_row_scr[...]   # [1, N]  1.0 => already selected / initial summary
        sel_col = sel_col_scr[...]   # [N, 1]

        # ---- LSTM cell (PyTorch gate order i,f,g,o; bias = b_ih + b_hh) ----
        gates = (jnp.dot(x, lstm_w_ref[0:D, :], preferred_element_type=jnp.float32)
                 + jnp.dot(h, lstm_w_ref[D:D + H, :], preferred_element_type=jnp.float32)
                 + lstm_b_ref[...])                                  # [1, 4H]
        i_g = _sigmoid(gates[:, 0:H])
        f_g = _sigmoid(gates[:, H:2 * H])
        g_g = jnp.tanh(gates[:, 2 * H:3 * H])
        o_g = _sigmoid(gates[:, 3 * H:4 * H])
        c_new = f_g * c + i_g * g_g
        h_new = o_g * jnp.tanh(c_new)                                # [1, H] == query

        # ---- MMR stand-in (cosine-sim importance/diversity), fully in-kernel ----
        am = attn_mem_ref[...]                                       # [N, D]
        row_norm = jnp.sqrt(jnp.sum(am * am, axis=1, keepdims=True))
        normed = am / (row_norm + 1e-8)                              # [N, D]
        doc = jnp.sum(am, axis=0, keepdims=True)                     # [1, D]
        doc_norm = jnp.sqrt(jnp.sum(doc * doc, axis=1, keepdims=True))
        docn = doc / (doc_norm + 1e-8)
        imp = _dot_nt(normed, docn)                                  # [N, 1]
        sim = _dot_nt(normed, normed)                                # [N, N]
        masked_sim = jnp.where(sel_row > 0.5, sim, NEG_SENTINEL)     # keep selected cols
        any_sel = jnp.max(sel_row, axis=1, keepdims=True) > 0.5      # [1, 1]
        div = jnp.where(any_sel, -jnp.max(masked_sim, axis=1, keepdims=True), 0.0)
        mmr = beta * imp + (1.0 - beta) * div                        # [N, 1]
        mmr = jnp.where(sel_col > 0.5, -1.0, mmr)                    # calc_score: -1 if selected

        # ---- MLP(1 -> 80 (zero-padded to 128) -> 1) + softmax(2x) over kps ----
        hid = jnp.maximum(mmr * mlp_w1_ref[...] + mlp_b1_ref[...], 0.0)          # [N, 128]
        s = jnp.sum(hid * mlp_w2_ref[...], axis=1, keepdims=True) + mlp_b2_ref[...]
        z = 2.0 * s
        z = z - jnp.max(z, axis=0, keepdims=True)
        e = jnp.exp(z)
        p = e * pl.reciprocal(jnp.sum(e, axis=0, keepdims=True), approx=True)    # [N, 1]

        # ---- pointer-net features: one fused matmul, split attn/hop halves ----
        kp_enc = am * p                                              # [N, D]
        feat = jnp.dot(kp_enc, wm_ref[...], preferred_element_type=jnp.float32)  # [N, 2H]
        attn_feat = feat[:, 0:H]
        hop_feat = feat[:, H:2 * H]

        # ---- n_hop glimpse attention ----
        q = h_new
        for _ in range(n_hop):
            qh = jnp.dot(q, wq_ref[0:H, :], preferred_element_type=jnp.float32)  # hop_wq
            t = jnp.tanh(hop_feat + qh)                              # [N, H]
            sc = _dot_nt(hop_v_ref[...], t)                          # [1, N] lane-dense
            sc = sc - jnp.max(sc, axis=1, keepdims=True)
            ee = jnp.exp(sc)
            pp = ee * pl.reciprocal(jnp.sum(ee, axis=1, keepdims=True), approx=True)
            q = jnp.dot(pp, hop_feat, preferred_element_type=jnp.float32)         # [1, H]

        # ---- unnormalized pointer scores + selected / initial-summary filter ----
        qa = jnp.dot(q, wq_ref[H:2 * H, :], preferred_element_type=jnp.float32)   # attn_wq
        t2 = jnp.tanh(attn_feat + qa)
        raw = _dot_nt(attn_v_ref[...], t2)                           # [1, N]
        masked = jnp.where(sel_row > 0.5, NEG_BIG, raw)              # [1, N]

        # ---- write this step's score row into the resident [num_outputs, N] output ----
        row_iota = lax.broadcasted_iota(jnp.int32, (num_outputs, N), 0)
        scores_ref[...] = jnp.where(row_iota == step, masked, scores_ref[...])

        # ---- in-kernel argmax (first max) as a one-hot; no scalar extraction ----
        lane_iota = lax.broadcasted_iota(jnp.int32, (1, N), 1)
        subl_iota = lax.broadcasted_iota(jnp.int32, (N, 1), 0)
        mx = jnp.max(masked, axis=1, keepdims=True)
        first_idx = jnp.min(jnp.where(masked >= mx, lane_iota, N),
                            axis=1, keepdims=True)                   # [1, 1] int32
        onehot_row = lane_iota == first_idx                          # [1, N]
        onehot_col = subl_iota == first_idx                          # [N, 1]

        # ---- carry state to the next extraction step ----
        h_scr[...] = h_new
        c_scr[...] = c_new
        x_scr[...] = jnp.sum(jnp.where(onehot_col, am, 0.0), axis=0, keepdims=True)
        sel_row_scr[...] = jnp.where(onehot_row, 1.0, sel_row)
        sel_col_scr[...] = jnp.where(onehot_col, 1.0, sel_col)

    return kernel


@functools.partial(jax.jit, static_argnames=("num_outputs", "n_hop", "beta"))
def fused_extract(attn_mem, h0, c0, x0, sel_row0, sel_col0, packed,
                  *, num_outputs, n_hop, beta):
    N = attn_mem.shape[0]
    D = x0.shape[-1]
    H = h0.shape[-1]
    operands = (attn_mem, h0, c0, x0, sel_row0, sel_col0,
                packed["lstm_w"], packed["lstm_b"], packed["wm"], packed["wq"],
                packed["hop_v"], packed["attn_v"],
                packed["mlp_w1"], packed["mlp_b1"], packed["mlp_w2"], packed["mlp_b2"])
    # Every operand: full-array block, constant index map => DMA'd once, resident
    # in VMEM across all grid steps.
    in_specs = [pl.BlockSpec(op.shape, lambda i: (0, 0)) for op in operands]
    out_spec = pl.BlockSpec((num_outputs, N), lambda i: (0, 0))

    grid_spec = pltpu.PrefetchScalarGridSpec(
        num_scalar_prefetch=0,
        grid=(num_outputs,),
        in_specs=in_specs,
        out_specs=out_spec,
        scratch_shapes=[
            pltpu.VMEM((1, H), jnp.float32),    # h
            pltpu.VMEM((1, H), jnp.float32),    # c
            pltpu.VMEM((1, D), jnp.float32),    # lstm_in
            pltpu.VMEM((1, N), jnp.float32),    # selected mask (row / lane-dense)
            pltpu.VMEM((N, 1), jnp.float32),    # selected mask (column)
        ],
    )
    return pl.pallas_call(
        _make_fused_kernel(num_outputs, n_hop, beta),
        out_shape=jax.ShapeDtypeStruct((num_outputs, N), jnp.float32),
        grid_spec=grid_spec,
        compiler_params=pltpu.CompilerParams(
            dimension_semantics=("arbitrary",)),   # steps are strictly sequential
    )(*operands)


# ----------------------------- parameter construction ------------------------------
def init_params(key):
    ks = jax.random.split(key, 16)

    def u(k, shape, scale=0.1):
        return jax.random.uniform(k, shape, jnp.float32, -1.0, 1.0) * scale

    return dict(
        init_i=u(ks[0], (IN_DIM,)),
        init_h=u(ks[1], (1, HIDDEN)),           # n_layer = 1
        init_c=u(ks[2], (1, HIDDEN)),
        wih_t=u(ks[3], (IN_DIM, 4 * HIDDEN)),   # LSTM cell W_ih^T
        whh_t=u(ks[4], (HIDDEN, 4 * HIDDEN)),   # LSTM cell W_hh^T
        b_lstm=u(ks[5], (1, 4 * HIDDEN)),       # b_ih + b_hh combined
        attn_wm=u(ks[6], (IN_DIM, HIDDEN)),
        attn_wq=u(ks[7], (HIDDEN, HIDDEN)),
        attn_v=u(ks[8], (1, HIDDEN)),
        hop_wm=u(ks[9], (IN_DIM, HIDDEN)),
        hop_wq=u(ks[10], (HIDDEN, HIDDEN)),
        hop_v=u(ks[11], (1, HIDDEN)),
        mlp_w1=u(ks[12], (1, MLP_HIDDEN)),      # fc1.weight^T  (Linear(1, 80))
        mlp_b1=u(ks[13], (1, MLP_HIDDEN)),
        mlp_w2=u(ks[14], (1, MLP_HIDDEN)),      # fc2.weight    (Linear(80, 1))
        mlp_b2=u(ks[15], (1, 1)),
    )


def pack_params(params):
    """Pack/pad weights into the kernel-resident layout (done once, host-side)."""
    pad = ((0, 0), (0, MLP_PAD - MLP_HIDDEN))
    return dict(
        lstm_w=jnp.concatenate([params["wih_t"], params["whh_t"]], axis=0),  # [64, 128]
        lstm_b=params["b_lstm"],                                             # [1, 128]
        wm=jnp.concatenate([params["attn_wm"], params["hop_wm"]], axis=1),   # [32, 64]
        wq=jnp.concatenate([params["hop_wq"], params["attn_wq"]], axis=0),   # [64, 32]
        hop_v=params["hop_v"],                                               # [1, 32]
        attn_v=params["attn_v"],                                             # [1, 32]
        mlp_w1=jnp.pad(params["mlp_w1"], pad),                               # [1, 128]
        mlp_b1=jnp.pad(params["mlp_b1"], pad),
        mlp_w2=jnp.pad(params["mlp_w2"], pad),
        mlp_b2=params["mlp_b2"],                                             # [1, 1]
    )


# -------------------- plain-JAX LSTM cell (cold path: initial_summ warm-up) --------
def _lstm_cell_host(x, h, c, lstm_w, lstm_b):
    gates = x @ lstm_w[:IN_DIM] + h @ lstm_w[IN_DIM:] + lstm_b
    i_g = _sigmoid(gates[:, 0:HIDDEN])
    f_g = _sigmoid(gates[:, HIDDEN:2 * HIDDEN])
    g_g = jnp.tanh(gates[:, 2 * HIDDEN:3 * HIDDEN])
    o_g = _sigmoid(gates[:, 3 * HIDDEN:4 * HIDDEN])
    c_new = f_g * c + i_g * g_g
    return o_g * jnp.tanh(c_new), c_new


# ------------------------------- forward (eval mode) -------------------------------
def actor_extractor_forward(params, attn_mem, num_outputs,
                            n_hop=N_HOP, beta=BETA, initial_summ=None):
    """Mirrors ActorExtractor.forward with method_mode='soft-attn', self.training=False.
    Returns (output_indices, output_scores)."""
    # TODO(synk): ScoreAgent's TF-IDF importance/diversity over *textual* keyphrases has
    # no JAX/Pallas equivalent; the in-kernel MMR stand-in uses cosine similarity over
    # the kp encodings (importance = cos(kp, doc-sum), diversity = -max cos(kp, selected)).
    N = attn_mem.shape[0]
    if initial_summ is None:
        initial_summ = []
    packed = pack_params(params)

    sel = np.zeros((N,), dtype=np.float32)      # selected + initial-summary mask
    x = params["init_i"][None, :]               # [1, IN_DIM]
    h, c = params["init_h"], params["init_c"]   # [1, HIDDEN] each (n_layer = 1)
    for kp_idx in initial_summ:                 # cold path: plain-JAX warm-up
        h, c = _lstm_cell_host(x, h, c, packed["lstm_w"], packed["lstm_b"])
        x = attn_mem[kp_idx][None, :]
        sel[kp_idx] = 1.0

    sel_row = jnp.asarray(sel)[None, :]         # [1, N]
    sel_col = jnp.asarray(sel)[:, None]         # [N, 1]

    # One fused kernel launch for ALL extraction steps, one host sync.
    scores = fused_extract(attn_mem, h, c, x, sel_row, sel_col, packed,
                           num_outputs=int(num_outputs), n_hop=int(n_hop),
                           beta=float(beta))
    scores = np.asarray(jax.block_until_ready(scores))   # [num_outputs, N]

    output_indices, output_scores = [], []
    for i in range(num_outputs):
        row = scores[i]
        out_idx = int(np.argmax(row))           # same first-max the kernel selected
        output_indices.append(out_idx)
        pos_sum = float(row[row >= 0.0].sum())
        output_scores.append(float(row[out_idx]) / pos_sum if pos_sum > 0 else 0.0)

    # TODO(synk): training-mode Categorical sampling (torch.distributions) not implemented.
    epsilon = min(output_scores) / 100.0
    for i, s in enumerate(output_scores):
        output_scores[i] = s / (i + 2) if i == 0 else min(s / (i + 2),
                                                          output_scores[i - 1] - epsilon)
    return output_indices, output_scores


if __name__ == "__main__":
    key = jax.random.PRNGKey(0)
    pkey, xkey = jax.random.split(key)
    params = init_params(pkey)
    attn_mem = jax.random.normal(xkey, (N_KP, IN_DIM), jnp.float32)

    out_indices, out_scores = actor_extractor_forward(params, attn_mem,
                                                      num_outputs=NUM_OUTPUTS)
    assert len(out_indices) == NUM_OUTPUTS and len(out_scores) == NUM_OUTPUTS
    assert len(set(out_indices)) == NUM_OUTPUTS          # mask enforced distinct picks
    print("KERNEL_OK")
</pallas_src>

<mosaic_0001>
module attributes {stable_mosaic.version = 11 : i64} {
  func.func @kernel(%arg0: i32, %arg1: memref<8x32xf32, #tpu.memory_space<vmem>>, %arg2: memref<1x32xf32, #tpu.memory_space<vmem>>, %arg3: memref<1x32xf32, #tpu.memory_space<vmem>>, %arg4: memref<1x32xf32, #tpu.memory_space<vmem>>, %arg5: memref<1x8xf32, #tpu.memory_space<vmem>>, %arg6: memref<8x1xf32, #tpu.memory_space<vmem>>, %arg7: memref<64x128xf32, #tpu.memory_space<vmem>>, %arg8: memref<1x128xf32, #tpu.memory_space<vmem>>, %arg9: memref<32x64xf32, #tpu.memory_space<vmem>>, %arg10: memref<64x32xf32, #tpu.memory_space<vmem>>, %arg11: memref<1x32xf32, #tpu.memory_space<vmem>>, %arg12: memref<1x32xf32, #tpu.memory_space<vmem>>, %arg13: memref<1x128xf32, #tpu.memory_space<vmem>>, %arg14: memref<1x128xf32, #tpu.memory_space<vmem>>, %arg15: memref<1x128xf32, #tpu.memory_space<vmem>>, %arg16: memref<1x1xf32, #tpu.memory_space<vmem>>, %arg17: memref<3x8xf32, #tpu.memory_space<vmem>>, %arg18: memref<1x32xf32, #tpu.memory_space<vmem>>, %arg19: memref<1x32xf32, #tpu.memory_space<vmem>>, %arg20: memref<1x32xf32, #tpu.memory_space<vmem>>, %arg21: memref<1x8xf32, #tpu.memory_space<vmem>>, %arg22: memref<8x1xf32, #tpu.memory_space<vmem>>) attributes {dimension_semantics = [#tpu.dimension_semantics<arbitrary>], iteration_bounds = array<i64: 3>, scalar_prefetch = 0 : i64, scratch_operands = 5 : i64, tpu.core_type = #tpu.core_type<tc>, window_params = [{pipeline_mode = #tpu.pipeline_mode<synchronous>, transform_indices = @transform_0, window_bounds = array<i64: 8, 32>}, {pipeline_mode = #tpu.pipeline_mode<synchronous>, transform_indices = @transform_1, window_bounds = array<i64: 1, 32>}, {pipeline_mode = #tpu.pipeline_mode<synchronous>, transform_indices = @transform_2, window_bounds = array<i64: 1, 32>}, {pipeline_mode = #tpu.pipeline_mode<synchronous>, transform_indices = @transform_3, window_bounds = array<i64: 1, 32>}, {pipeline_mode = #tpu.pipeline_mode<synchronous>, transform_indices = @transform_4, window_bounds = array<i64: 1, 8>}, {pipeline_mode = #tpu.pipeline_mode<synchronous>, transform_indices = @transform_5, window_bounds = array<i64: 8, 1>}, {pipeline_mode = #tpu.pipeline_mode<synchronous>, transform_indices = @transform_6, window_bounds = array<i64: 64, 128>}, {pipeline_mode = #tpu.pipeline_mode<synchronous>, transform_indices = @transform_7, window_bounds = array<i64: 1, 128>}, {pipeline_mode = #tpu.pipeline_mode<synchronous>, transform_indices = @transform_8, window_bounds = array<i64: 32, 64>}, {pipeline_mode = #tpu.pipeline_mode<synchronous>, transform_indices = @transform_9, window_bounds = array<i64: 64, 32>}, {pipeline_mode = #tpu.pipeline_mode<synchronous>, transform_indices = @transform_10, window_bounds = array<i64: 1, 32>}, {pipeline_mode = #tpu.pipeline_mode<synchronous>, transform_indices = @transform_11, window_bounds = array<i64: 1, 32>}, {pipeline_mode = #tpu.pipeline_mode<synchronous>, transform_indices = @transform_12, window_bounds = array<i64: 1, 128>}, {pipeline_mode = #tpu.pipeline_mode<synchronous>, transform_indices = @transform_13, window_bounds = array<i64: 1, 128>}, {pipeline_mode = #tpu.pipeline_mode<synchronous>, transform_indices = @transform_14, window_bounds = array<i64: 1, 128>}, {pipeline_mode = #tpu.pipeline_mode<synchronous>, transform_indices = @transform_15, window_bounds = array<i64: 1, 1>}, {pipeline_mode = #tpu.pipeline_mode<synchronous>, transform_indices = @transform_16, window_bounds = array<i64: 3, 8>}]} {
    %c0_i32 = arith.constant 0 : i32
    %0 = arith.cmpi eq, %arg0, %c0_i32 : i32
    %1 = arith.extui %0 : i1 to i32
    %c0_i32_0 = arith.constant 0 : i32
    %2 = arith.cmpi ne, %1, %c0_i32_0 : i32
    scf.if %2 {
      %c0_98 = arith.constant 0 : index
      %c0_99 = arith.constant 0 : index
      %195 = vector.load %arg2[%c0_98, %c0_99] : memref<1x32xf32, #tpu.memory_space<vmem>>, vector<1x32xf32>
      %c0_100 = arith.constant 0 : index
      %c0_101 = arith.constant 0 : index
      %196 = vector.load %arg18[%c0_100, %c0_101] : memref<1x32xf32, #tpu.memory_space<vmem>>, vector<1x32xf32>
      tpu.vector_store %arg18[%c0_100, %c0_101], %195 {strides = array<i32>} : memref<1x32xf32, #tpu.memory_space<vmem>>, vector<1x32xf32>,
      %c0_102 = arith.constant 0 : index
      %c0_103 = arith.constant 0 : index
      %197 = vector.load %arg3[%c0_102, %c0_103] : memref<1x32xf32, #tpu.memory_space<vmem>>, vector<1x32xf32>
      %c0_104 = arith.constant 0 : index
      %c0_105 = arith.constant 0 : index
      %198 = vector.load %arg19[%c0_104, %c0_105] : memref<1x32xf32, #tpu.memory_space<vmem>>, vector<1x32xf32>
      tpu.vector_store %arg19[%c0_104, %c0_105], %197 {strides = array<i32>} : memref<1x32xf32, #tpu.memory_space<vmem>>, vector<1x32xf32>,
      %c0_106 = arith.constant 0 : index
      %c0_107 = arith.constant 0 : index
      %199 = vector.load %arg4[%c0_106, %c0_107] : memref<1x32xf32, #tpu.memory_space<vmem>>, vector<1x32xf32>
      %c0_108 = arith.constant 0 : index
      %c0_109 = arith.constant 0 : index
      %200 = vector.load %arg20[%c0_108, %c0_109] : memref<1x32xf32, #tpu.memory_space<vmem>>, vector<1x32xf32>
      tpu.vector_store %arg20[%c0_108, %c0_109], %199 {strides = array<i32>} : memref<1x32xf32, #tpu.memory_space<vmem>>, vector<1x32xf32>,
      %c0_110 = arith.constant 0 : index
      %c0_111 = arith.constant 0 : index
      %201 = vector.load %arg5[%c0_110, %c0_111] : memref<1x8xf32, #tpu.memory_space<vmem>>, vector<1x8xf32>
      %c0_112 = arith.constant 0 : index
      %c0_113 = arith.constant 0 : index
      %202 = vector.load %arg21[%c0_112, %c0_113] : memref<1x8xf32, #tpu.memory_space<vmem>>, vector<1x8xf32>
      tpu.vector_store %arg21[%c0_112, %c0_113], %201 {strides = array<i32>} : memref<1x8xf32, #tpu.memory_space<vmem>>, vector<1x8xf32>,
      %c0_114 = arith.constant 0 : index
      %c0_115 = arith.constant 0 : index
      %203 = vector.load %arg6[%c0_114, %c0_115] : memref<8x1xf32, #tpu.memory_space<vmem>>, vector<8x1xf32>
      %c0_116 = arith.constant 0 : index
      %c0_117 = arith.constant 0 : index
      %204 = vector.load %arg22[%c0_116, %c0_117] : memref<8x1xf32, #tpu.memory_space<vmem>>, vector<8x1xf32>
      tpu.vector_store %arg22[%c0_116, %c0_117], %203 {strides = array<i32>} : memref<8x1xf32, #tpu.memory_space<vmem>>, vector<8x1xf32>,
      %cst_118 = arith.constant 0.000000e+00 : f32
      %205 = vector.broadcast %cst_118 : f32 to vector<3x8xf32>
      %c0_119 = arith.constant 0 : index
      %c0_120 = arith.constant 0 : index
      %206 = vector.load %arg17[%c0_119, %c0_120] : memref<3x8xf32, #tpu.memory_space<vmem>>, vector<3x8xf32>
      tpu.vector_store %arg17[%c0_119, %c0_120], %205 {strides = array<i32>} : memref<3x8xf32, #tpu.memory_space<vmem>>, vector<3x8xf32>,
    } else {
    }
    %c0 = arith.constant 0 : index
    %c0_1 = arith.constant 0 : index
    %3 = vector.load %arg20[%c0, %c0_1] : memref<1x32xf32, #tpu.memory_space<vmem>>, vector<1x32xf32>
    %c0_2 = arith.constant 0 : index
    %c0_3 = arith.constant 0 : index
    %4 = vector.load %arg18[%c0_2, %c0_3] : memref<1x32xf32, #tpu.memory_space<vmem>>, vector<1x32xf32>
    %c0_4 = arith.constant 0 : index
    %c0_5 = arith.constant 0 : index
    %5 = vector.load %arg19[%c0_4, %c0_5] : memref<1x32xf32, #tpu.memory_space<vmem>>, vector<1x32xf32>
    %c0_6 = arith.constant 0 : index
    %c0_7 = arith.constant 0 : index
    %6 = vector.load %arg21[%c0_6, %c0_7] : memref<1x8xf32, #tpu.memory_space<vmem>>, vector<1x8xf32>
    %c0_8 = arith.constant 0 : index
    %c0_9 = arith.constant 0 : index
    %7 = vector.load %arg22[%c0_8, %c0_9] : memref<8x1xf32, #tpu.memory_space<vmem>>, vector<8x1xf32>
    %c0_10 = arith.constant 0 : index
    %c0_11 = arith.constant 0 : index
    %8 = vector.load %arg7[%c0_10, %c0_11] : memref<64x128xf32, #tpu.memory_space<vmem>>, vector<32x128xf32>
    %cst = arith.constant dense<0.000000e+00> : vector<1x128xf32>
    %9 = tpu.matmul %3, %8, %cst {dimension_numbers = #tpu.dot_dimension_numbers<[1], [0], [0], [1], [0, 0, 1, 1], [], []>} : vector<1x32xf32>, vector<32x128xf32>, vector<1x128xf32> -> vector<1x128xf32>
    %c32 = arith.constant 32 : index
    %c0_12 = arith.constant 0 : index
    %10 = vector.load %arg7[%c32, %c0_12] : memref<64x128xf32, #tpu.memory_space<vmem>>, vector<32x128xf32>
    %cst_13 = arith.constant dense<0.000000e+00> : vector<1x128xf32>
    %11 = tpu.matmul %4, %10, %cst_13 {dimension_numbers = #tpu.dot_dimension_numbers<[1], [0], [0], [1], [0, 0, 1, 1], [], []>} : vector<1x32xf32>, vector<32x128xf32>, vector<1x128xf32> -> vector<1x128xf32>
    %12 = arith.addf %9, %11 : vector<1x128xf32>
    %c0_14 = arith.constant 0 : index
    %c0_15 = arith.constant 0 : index
    %13 = vector.load %arg8[%c0_14, %c0_15] : memref<1x128xf32, #tpu.memory_space<vmem>>, vector<1x128xf32>
    %14 = arith.addf %12, %13 : vector<1x128xf32>
    %15 = vector.extract_strided_slice %14 {offsets = [0, 0], sizes = [1, 32], strides = [1, 1]} : vector<1x128xf32> to vector<1x32xf32>
    %cst_16 = arith.constant 5.000000e-01 : f32
    %16 = vector.broadcast %cst_16 : f32 to vector<1x32xf32>
    %17 = arith.mulf %16, %15 : vector<1x32xf32>
    %18 = math.tanh %17 : vector<1x32xf32>
    %cst_17 = arith.constant 1.000000e+00 : f32
    %19 = vector.broadcast %cst_17 : f32 to vector<1x32xf32>
    %20 = arith.addf %18, %19 : vector<1x32xf32>
    %cst_18 = arith.constant 5.000000e-01 : f32
    %21 = vector.broadcast %cst_18 : f32 to vector<1x32xf32>
    %22 = arith.mulf %21, %20 : vector<1x32xf32>
    %23 = vector.extract_strided_slice %14 {offsets = [0, 32], sizes = [1, 32], strides = [1, 1]} : vector<1x128xf32> to vector<1x32xf32>
    %cst_19 = arith.constant 5.000000e-01 : f32
    %24 = vector.broadcast %cst_19 : f32 to vector<1x32xf32>
    %25 = arith.mulf %24, %23 : vector<1x32xf32>
    %26 = math.tanh %25 : vector<1x32xf32>
    %cst_20 = arith.constant 1.000000e+00 : f32
    %27 = vector.broadcast %cst_20 : f32 to vector<1x32xf32>
    %28 = arith.addf %26, %27 : vector<1x32xf32>
    %cst_21 = arith.constant 5.000000e-01 : f32
    %29 = vector.broadcast %cst_21 : f32 to vector<1x32xf32>
    %30 = arith.mulf %29, %28 : vector<1x32xf32>
    %31 = vector.extract_strided_slice %14 {offsets = [0, 64], sizes = [1, 32], strides = [1, 1]} : vector<1x128xf32> to vector<1x32xf32>
    %32 = math.tanh %31 : vector<1x32xf32>
    %33 = vector.extract_strided_slice %14 {offsets = [0, 96], sizes = [1, 32], strides = [1, 1]} : vector<1x128xf32> to vector<1x32xf32>
    %cst_22 = arith.constant 5.000000e-01 : f32
    %34 = vector.broadcast %cst_22 : f32 to vector<1x32xf32>
    %35 = arith.mulf %34, %33 : vector<1x32xf32>
    %36 = math.tanh %35 : vector<1x32xf32>
    %cst_23 = arith.constant 1.000000e+00 : f32
    %37 = vector.broadcast %cst_23 : f32 to vector<1x32xf32>
    %38 = arith.addf %36, %37 : vector<1x32xf32>
    %cst_24 = arith.constant 5.000000e-01 : f32
    %39 = vector.broadcast %cst_24 : f32 to vector<1x32xf32>
    %40 = arith.mulf %39, %38 : vector<1x32xf32>
    %41 = arith.mulf %30, %5 : vector<1x32xf32>
    %42 = arith.mulf %22, %32 : vector<1x32xf32>
    %43 = arith.addf %41, %42 : vector<1x32xf32>
    %44 = math.tanh %43 : vector<1x32xf32>
    %45 = arith.mulf %40, %44 : vector<1x32xf32>
    %c0_25 = arith.constant 0 : index
    %c0_26 = arith.constant 0 : index
    %46 = vector.load %arg1[%c0_25, %c0_26] : memref<8x32xf32, #tpu.memory_space<vmem>>, vector<8x32xf32>
    %47 = arith.mulf %46, %46 : vector<8x32xf32>
    %cst_27 = arith.constant dense<0.000000e+00> : vector<8xf32>
    %48 = vector.multi_reduction <add>, %47, %cst_27 [1] : vector<8x32xf32> to vector<8xf32>
    %49 = vector.shape_cast %48 : vector<8xf32> to vector<8x1xf32>
    %50 = math.sqrt %49 : vector<8x1xf32>
    %cst_28 = arith.constant 9.99999993E-9 : f32
    %51 = vector.broadcast %cst_28 : f32 to vector<8x1xf32>
    %52 = arith.addf %50, %51 : vector<8x1xf32>
    %53 = vector.broadcast %52 : vector<8x1xf32> to vector<8x32xf32>
    %54 = arith.divf %46, %53 : vector<8x32xf32>
    %cst_29 = arith.constant dense<0.000000e+00> : vector<32xf32>
    %55 = vector.multi_reduction <add>, %46, %cst_29 [0] : vector<8x32xf32> to vector<32xf32>
    %56 = vector.shape_cast %55 : vector<32xf32> to vector<1x32xf32>
    %57 = arith.mulf %56, %56 : vector<1x32xf32>
    %cst_30 = arith.constant dense<0.000000e+00> : vector<1xf32>
    %58 = vector.multi_reduction <add>, %57, %cst_30 [1] : vector<1x32xf32> to vector<1xf32>
    %59 = vector.shape_cast %58 : vector<1xf32> to vector<1x1xf32>
    %60 = math.sqrt %59 : vector<1x1xf32>
    %cst_31 = arith.constant 9.99999993E-9 : f32
    %61 = vector.broadcast %cst_31 : f32 to vector<1x1xf32>
    %62 = arith.addf %60, %61 : vector<1x1xf32>
    %63 = vector.broadcast %62 : vector<1x1xf32> to vector<1x32xf32>
    %64 = arith.divf %56, %63 : vector<1x32xf32>
    %cst_32 = arith.constant dense<0.000000e+00> : vector<8x1xf32>
    %65 = tpu.matmul %54, %64, %cst_32 {dimension_numbers = #tpu.dot_dimension_numbers<[1], [1], [0], [0], [0, 0, 1, 0], [], []>} : vector<8x32xf32>, vector<1x32xf32>, vector<8x1xf32> -> vector<8x1xf32>
    %cst_33 = arith.constant dense<0.000000e+00> : vector<8x8xf32>
    %66 = tpu.matmul %54, %54, %cst_33 {dimension_numbers = #tpu.dot_dimension_numbers<[1], [1], [0], [0], [0, 0, 1, 0], [], []>} : vector<8x32xf32>, vector<8x32xf32>, vector<8x8xf32> -> vector<8x8xf32>
    %cst_34 = arith.constant 5.000000e-01 : f32
    %67 = vector.broadcast %cst_34 : f32 to vector<1x8xf32>
    %68 = arith.cmpf ogt, %6, %67 : vector<1x8xf32>
    %cst_35 = arith.constant -1.000000e+30 : f32
    %69 = vector.shape_cast %68 : vector<1x8xi1> to vector<1x8xi1>
    %70 = vector.broadcast %69 : vector<1x8xi1> to vector<8x8xi1>
    %71 = vector.broadcast %cst_35 : f32 to vector<8x8xf32>
    %72 = arith.select %70, %66, %71 : vector<8x8xi1>, vector<8x8xf32>
    %cst_36 = arith.constant dense<0xFF800000> : vector<1xf32>
    %73 = vector.multi_reduction <maximumf>, %6, %cst_36 [1] : vector<1x8xf32> to vector<1xf32>
    %74 = vector.shape_cast %73 : vector<1xf32> to vector<1x1xf32>
    %cst_37 = arith.constant 5.000000e-01 : f32
    %75 = vector.broadcast %cst_37 : f32 to vector<1x1xf32>
    %76 = arith.cmpf ogt, %74, %75 : vector<1x1xf32>
    %cst_38 = arith.constant dense<0xFF800000> : vector<8xf32>
    %77 = vector.multi_reduction <maximumf>, %72, %cst_38 [1] : vector<8x8xf32> to vector<8xf32>
    %78 = vector.shape_cast %77 : vector<8xf32> to vector<8x1xf32>
    %cst_39 = arith.constant 0.000000e+00 : f32
    %79 = vector.broadcast %cst_39 : f32 to vector<8x1xf32>
    %80 = arith.subf %79, %78 : vector<8x1xf32>
    %cst_40 = arith.constant 0.000000e+00 : f32
    %81 = vector.shape_cast %76 : vector<1x1xi1> to vector<1x1xi1>
    %82 = vector.broadcast %81 : vector<1x1xi1> to vector<8x1xi1>
    %83 = vector.broadcast %cst_40 : f32 to vector<8x1xf32>
    %84 = arith.select %82, %80, %83 : vector<8x1xi1>, vector<8x1xf32>
    %cst_41 = arith.constant 5.000000e-01 : f32
    %85 = vector.broadcast %cst_41 : f32 to vector<8x1xf32>
    %86 = arith.mulf %85, %65 : vector<8x1xf32>
    %cst_42 = arith.constant 5.000000e-01 : f32
    %87 = vector.broadcast %cst_42 : f32 to vector<8x1xf32>
    %88 = arith.mulf %87, %84 : vector<8x1xf32>
    %89 = arith.addf %86, %88 : vector<8x1xf32>
    %cst_43 = arith.constant 5.000000e-01 : f32
    %90 = vector.broadcast %cst_43 : f32 to vector<8x1xf32>
    %91 = arith.cmpf ogt, %7, %90 : vector<8x1xf32>
    %cst_44 = arith.constant -1.000000e+00 : f32
    %92 = vector.broadcast %cst_44 : f32 to vector<8x1xf32>
    %93 = arith.select %91, %92, %89 : vector<8x1xi1>, vector<8x1xf32>
    %c0_45 = arith.constant 0 : index
    %c0_46 = arith.constant 0 : index
    %94 = vector.load %arg13[%c0_45, %c0_46] : memref<1x128xf32, #tpu.memory_space<vmem>>, vector<1x128xf32>
    %95 = vector.broadcast %93 : vector<8x1xf32> to vector<8x128xf32>
    %96 = vector.broadcast %94 : vector<1x128xf32> to vector<8x128xf32>
    %97 = arith.mulf %95, %96 : vector<8x128xf32>
    %c0_47 = arith.constant 0 : index
    %c0_48 = arith.constant 0 : index
    %98 = vector.load %arg14[%c0_47, %c0_48] : memref<1x128xf32, #tpu.memory_space<vmem>>, vector<1x128xf32>
    %99 = vector.broadcast %98 : vector<1x128xf32> to vector<8x128xf32>
    %100 = arith.addf %97, %99 : vector<8x128xf32>
    %cst_49 = arith.constant 0.000000e+00 : f32
    %101 = vector.broadcast %cst_49 : f32 to vector<8x128xf32>
    %102 = arith.maximumf %100, %101 : vector<8x128xf32>
    %c0_50 = arith.constant 0 : index
    %c0_51 = arith.constant 0 : index
    %103 = vector.load %arg15[%c0_50, %c0_51] : memref<1x128xf32, #tpu.memory_space<vmem>>, vector<1x128xf32>
    %104 = vector.broadcast %103 : vector<1x128xf32> to vector<8x128xf32>
    %105 = arith.mulf %102, %104 : vector<8x128xf32>
    %cst_52 = arith.constant dense<0.000000e+00> : vector<8xf32>
    %106 = vector.multi_reduction <add>, %105, %cst_52 [1] : vector<8x128xf32> to vector<8xf32>
    %107 = vector.shape_cast %106 : vector<8xf32> to vector<8x1xf32>
    %c0_53 = arith.constant 0 : index
    %c0_54 = arith.constant 0 : index
    %108 = vector.load %arg16[%c0_53, %c0_54] : memref<1x1xf32, #tpu.memory_space<vmem>>, vector<1x1xf32>
    %109 = vector.broadcast %108 : vector<1x1xf32> to vector<8x1xf32>
    %110 = arith.addf %107, %109 : vector<8x1xf32>
    %cst_55 = arith.constant 2.000000e+00 : f32
    %111 = vector.broadcast %cst_55 : f32 to vector<8x1xf32>
    %112 = arith.mulf %111, %110 : vector<8x1xf32>
    %cst_56 = arith.constant dense<0xFF800000> : vector<1xf32>
    %113 = vector.multi_reduction <maximumf>, %112, %cst_56 [0] : vector<8x1xf32> to vector<1xf32>
    %114 = vector.shape_cast %113 : vector<1xf32> to vector<1x1xf32>
    %115 = vector.broadcast %114 : vector<1x1xf32> to vector<8x1xf32>
    %116 = arith.subf %112, %115 : vector<8x1xf32>
    %117 = math.exp %116 : vector<8x1xf32>
    %cst_57 = arith.constant dense<0.000000e+00> : vector<1xf32>
    %118 = vector.multi_reduction <add>, %117, %cst_57 [0] : vector<8x1xf32> to vector<1xf32>
    %119 = vector.shape_cast %118 : vector<1xf32> to vector<1x1xf32>
    %120 = tpu.reciprocal %119 {approx = true} : vector<1x1xf32> -> vector<1x1xf32>
    %121 = vector.broadcast %120 : vector<1x1xf32> to vector<8x1xf32>
    %122 = arith.mulf %117, %121 : vector<8x1xf32>
    %123 = vector.broadcast %122 : vector<8x1xf32> to vector<8x32xf32>
    %124 = arith.mulf %46, %123 : vector<8x32xf32>
    %c0_58 = arith.constant 0 : index
    %c0_59 = arith.constant 0 : index
    %125 = vector.load %arg9[%c0_58, %c0_59] : memref<32x64xf32, #tpu.memory_space<vmem>>, vector<32x64xf32>
    %cst_60 = arith.constant dense<0.000000e+00> : vector<8x64xf32>
    %126 = tpu.matmul %124, %125, %cst_60 {dimension_numbers = #tpu.dot_dimension_numbers<[1], [0], [0], [1], [0, 0, 1, 1], [], []>} : vector<8x32xf32>, vector<32x64xf32>, vector<8x64xf32> -> vector<8x64xf32>
    %127 = vector.extract_strided_slice %126 {offsets = [0, 0], sizes = [8, 32], strides = [1, 1]} : vector<8x64xf32> to vector<8x32xf32>
    %128 = vector.extract_strided_slice %126 {offsets = [0, 32], sizes = [8, 32], strides = [1, 1]} : vector<8x64xf32> to vector<8x32xf32>
    %c0_61 = arith.constant 0 : index
    %c0_62 = arith.constant 0 : index
    %129 = vector.load %arg10[%c0_61, %c0_62] : memref<64x32xf32, #tpu.memory_space<vmem>>, vector<32x32xf32>
    %cst_63 = arith.constant dense<0.000000e+00> : vector<1x32xf32>
    %130 = tpu.matmul %45, %129, %cst_63 {dimension_numbers = #tpu.dot_dimension_numbers<[1], [0], [0], [1], [0, 0, 1, 1], [], []>} : vector<1x32xf32>, vector<32x32xf32>, vector<1x32xf32> -> vector<1x32xf32>
    %131 = vector.broadcast %130 : vector<1x32xf32> to vector<8x32xf32>
    %132 = arith.addf %128, %131 : vector<8x32xf32>
    %133 = math.tanh %132 : vector<8x32xf32>
    %c0_64 = arith.constant 0 : index
    %c0_65 = arith.constant 0 : index
    %134 = vector.load %arg11[%c0_64, %c0_65] : memref<1x32xf32, #tpu.memory_space<vmem>>, vector<1x32xf32>
    %cst_66 = arith.constant dense<0.000000e+00> : vector<1x8xf32>
    %135 = tpu.matmul %134, %133, %cst_66 {dimension_numbers = #tpu.dot_dimension_numbers<[1], [1], [0], [0], [0, 0, 1, 0], [], []>} : vector<1x32xf32>, vector<8x32xf32>, vector<1x8xf32> -> vector<1x8xf32>
    %cst_67 = arith.constant dense<0xFF800000> : vector<1xf32>
    %136 = vector.multi_reduction <maximumf>, %135, %cst_67 [1] : vector<1x8xf32> to vector<1xf32>
    %137 = vector.shape_cast %136 : vector<1xf32> to vector<1x1xf32>
    %138 = vector.broadcast %137 : vector<1x1xf32> to vector<1x8xf32>
    %139 = arith.subf %135, %138 : vector<1x8xf32>
    %140 = math.exp %139 : vector<1x8xf32>
    %cst_68 = arith.constant dense<0.000000e+00> : vector<1xf32>
    %141 = vector.multi_reduction <add>, %140, %cst_68 [1] : vector<1x8xf32> to vector<1xf32>
    %142 = vector.shape_cast %141 : vector<1xf32> to vector<1x1xf32>
    %143 = tpu.reciprocal %142 {approx = true} : vector<1x1xf32> -> vector<1x1xf32>
    %144 = vector.broadcast %143 : vector<1x1xf32> to vector<1x8xf32>
    %145 = arith.mulf %140, %144 : vector<1x8xf32>
    %cst_69 = arith.constant dense<0.000000e+00> : vector<1x32xf32>
    %146 = tpu.matmul %145, %128, %cst_69 {dimension_numbers = #tpu.dot_dimension_numbers<[1], [0], [0], [1], [0, 0, 1, 1], [], []>} : vector<1x8xf32>, vector<8x32xf32>, vector<1x32xf32> -> vector<1x32xf32>
    %c32_70 = arith.constant 32 : index
    %c0_71 = arith.constant 0 : index
    %147 = vector.load %arg10[%c32_70, %c0_71] : memref<64x32xf32, #tpu.memory_space<vmem>>, vector<32x32xf32>
    %cst_72 = arith.constant dense<0.000000e+00> : vector<1x32xf32>
    %148 = tpu.matmul %146, %147, %cst_72 {dimension_numbers = #tpu.dot_dimension_numbers<[1], [0], [0], [1], [0, 0, 1, 1], [], []>} : vector<1x32xf32>, vector<32x32xf32>, vector<1x32xf32> -> vector<1x32xf32>
    %149 = vector.broadcast %148 : vector<1x32xf32> to vector<8x32xf32>
    %150 = arith.addf %127, %149 : vector<8x32xf32>
    %151 = math.tanh %150 : vector<8x32xf32>
    %c0_73 = arith.constant 0 : index
    %c0_74 = arith.constant 0 : index
    %152 = vector.load %arg12[%c0_73, %c0_74] : memref<1x32xf32, #tpu.memory_space<vmem>>, vector<1x32xf32>
    %cst_75 = arith.constant dense<0.000000e+00> : vector<1x8xf32>
    %153 = tpu.matmul %152, %151, %cst_75 {dimension_numbers = #tpu.dot_dimension_numbers<[1], [1], [0], [0], [0, 0, 1, 0], [], []>} : vector<1x32xf32>, vector<8x32xf32>, vector<1x8xf32> -> vector<1x8xf32>
    %cst_76 = arith.constant 5.000000e-01 : f32
    %154 = vector.broadcast %cst_76 : f32 to vector<1x8xf32>
    %155 = arith.cmpf ogt, %6, %154 : vector<1x8xf32>
    %cst_77 = arith.constant -9.99999984E+17 : f32
    %156 = vector.broadcast %cst_77 : f32 to vector<1x8xf32>
    %157 = arith.select %155, %156, %153 : vector<1x8xi1>, vector<1x8xf32>
    %158 = tpu.iota {dimensions = array<i32: 0>} : vector<3x8xi32>
    %159 = vector.broadcast %arg0 : i32 to vector<3x8xi32>
    %160 = arith.cmpi eq, %158, %159 : vector<3x8xi32>
    %c0_78 = arith.constant 0 : index
    %c0_79 = arith.constant 0 : index
    %161 = vector.load %arg17[%c0_78, %c0_79] : memref<3x8xf32, #tpu.memory_space<vmem>>, vector<3x8xf32>
    %162 = vector.shape_cast %157 : vector<1x8xf32> to vector<1x8xf32>
    %163 = vector.broadcast %162 : vector<1x8xf32> to vector<3x8xf32>
    %164 = arith.select %160, %163, %161 : vector<3x8xi1>, vector<3x8xf32>
    %c0_80 = arith.constant 0 : index
    %c0_81 = arith.constant 0 : index
    %165 = vector.load %arg17[%c0_80, %c0_81] : memref<3x8xf32, #tpu.memory_space<vmem>>, vector<3x8xf32>
    tpu.vector_store %arg17[%c0_80, %c0_81], %164 {strides = array<i32>} : memref<3x8xf32, #tpu.memory_space<vmem>>, vector<3x8xf32>,
    %166 = tpu.iota {dimensions = array<i32: 1>} : vector<1x8xi32>
    %167 = tpu.iota {dimensions = array<i32: 0>} : vector<8x1xi32>
    %cst_82 = arith.constant dense<0xFF800000> : vector<1xf32>
    %168 = vector.multi_reduction <maximumf>, %157, %cst_82 [1] : vector<1x8xf32> to vector<1xf32>
    %169 = vector.shape_cast %168 : vector<1xf32> to vector<1x1xf32>
    %170 = vector.broadcast %169 : vector<1x1xf32> to vector<1x8xf32>
    %171 = arith.cmpf oge, %157, %170 : vector<1x8xf32>
    %c8_i32 = arith.constant 8 : i32
    %172 = vector.broadcast %c8_i32 : i32 to vector<1x8xi32>
    %173 = arith.select %171, %166, %172 : vector<1x8xi1>, vector<1x8xi32>
    %cst_83 = arith.constant dense<2147483647> : vector<1xi32>
    %174 = vector.multi_reduction <minsi>, %173, %cst_83 [1] : vector<1x8xi32> to vector<1xi32>
    %175 = vector.shape_cast %174 : vector<1xi32> to vector<1x1xi32>
    %176 = vector.broadcast %175 : vector<1x1xi32> to vector<1x8xi32>
    %177 = arith.cmpi eq, %166, %176 : vector<1x8xi32>
    %178 = vector.broadcast %175 : vector<1x1xi32> to vector<8x1xi32>
    %179 = arith.cmpi eq, %167, %178 : vector<8x1xi32>
    %c0_84 = arith.constant 0 : index
    %c0_85 = arith.constant 0 : index
    %180 = vector.load %arg18[%c0_84, %c0_85] : memref<1x32xf32, #tpu.memory_space<vmem>>, vector<1x32xf32>
    tpu.vector_store %arg18[%c0_84, %c0_85], %45 {strides = array<i32>} : memref<1x32xf32, #tpu.memory_space<vmem>>, vector<1x32xf32>,
    %c0_86 = arith.constant 0 : index
    %c0_87 = arith.constant 0 : index
    %181 = vector.load %arg19[%c0_86, %c0_87] : memref<1x32xf32, #tpu.memory_space<vmem>>, vector<1x32xf32>
    tpu.vector_store %arg19[%c0_86, %c0_87], %43 {strides = array<i32>} : memref<1x32xf32, #tpu.memory_space<vmem>>, vector<1x32xf32>,
    %cst_88 = arith.constant 0.000000e+00 : f32
    %182 = vector.shape_cast %179 : vector<8x1xi1> to vector<8x1xi1>
    %183 = vector.broadcast %182 : vector<8x1xi1> to vector<8x32xi1>
    %184 = vector.broadcast %cst_88 : f32 to vector<8x32xf32>
    %185 = arith.select %183, %46, %184 : vector<8x32xi1>, vector<8x32xf32>
    %cst_89 = arith.constant dense<0.000000e+00> : vector<32xf32>
    %186 = vector.multi_reduction <add>, %185, %cst_89 [0] : vector<8x32xf32> to vector<32xf32>
    %187 = vector.shape_cast %186 : vector<32xf32> to vector<1x32xf32>
    %c0_90 = arith.constant 0 : index
    %c0_91 = arith.constant 0 : index
    %188 = vector.load %arg20[%c0_90, %c0_91] : memref<1x32xf32, #tpu.memory_space<vmem>>, vector<1x32xf32>
    tpu.vector_store %arg20[%c0_90, %c0_91], %187 {strides = array<i32>} : memref<1x32xf32, #tpu.memory_space<vmem>>, vector<1x32xf32>,
    %cst_92 = arith.constant 1.000000e+00 : f32
    %189 = vector.broadcast %cst_92 : f32 to vector<1x8xf32>
    %190 = arith.select %177, %189, %6 : vector<1x8xi1>, vector<1x8xf32>
    %c0_93 = arith.constant 0 : index
    %c0_94 = arith.constant 0 : index
    %191 = vector.load %arg21[%c0_93, %c0_94] : memref<1x8xf32, #tpu.memory_space<vmem>>, vector<1x8xf32>
    tpu.vector_store %arg21[%c0_93, %c0_94], %190 {strides = array<i32>} : memref<1x8xf32, #tpu.memory_space<vmem>>, vector<1x8xf32>,
    %cst_95 = arith.constant 1.000000e+00 : f32
    %192 = vector.broadcast %cst_95 : f32 to vector<8x1xf32>
    %193 = arith.select %179, %192, %7 : vector<8x1xi1>, vector<8x1xf32>
    %c0_96 = arith.constant 0 : index
    %c0_97 = arith.constant 0 : index
    %194 = vector.load %arg22[%c0_96, %c0_97] : memref<8x1xf32, #tpu.memory_space<vmem>>, vector<8x1xf32>
    tpu.vector_store %arg22[%c0_96, %c0_97], %193 {strides = array<i32>} : memref<8x1xf32, #tpu.memory_space<vmem>>, vector<8x1xf32>,
    return
  }
  func.func @transform_0(%arg0: i32) -> (i32, i32) {
    %c0_i32 = arith.constant 0 : i32
    %c0_i32_0 = arith.constant 0 : i32
    %c0_i32_1 = arith.constant 0 : i32
    return %c0_i32, %c0_i32_0 : i32, i32
  }
  func.func @transform_1(%arg0: i32) -> (i32, i32) {
    %c0_i32 = arith.constant 0 : i32
    %c0_i32_0 = arith.constant 0 : i32
    %c0_i32_1 = arith.constant 0 : i32
    return %c0_i32, %c0_i32_0 : i32, i32
  }
  func.func @transform_2(%arg0: i32) -> (i32, i32) {
    %c0_i32 = arith.constant 0 : i32
    %c0_i32_0 = arith.constant 0 : i32
    %c0_i32_1 = arith.constant 0 : i32
    return %c0_i32, %c0_i32_0 : i32, i32
  }
  func.func @transform_3(%arg0: i32) -> (i32, i32) {
    %c0_i32 = arith.constant 0 : i32
    %c0_i32_0 = arith.constant 0 : i32
    %c0_i32_1 = arith.constant 0 : i32
    return %c0_i32, %c0_i32_0 : i32, i32
  }
  func.func @transform_4(%arg0: i32) -> (i32, i32) {
    %c0_i32 = arith.constant 0 : i32
    %c0_i32_0 = arith.constant 0 : i32
    %c0_i32_1 = arith.constant 0 : i32
    return %c0_i32, %c0_i32_0 : i32, i32
  }
  func.func @transform_5(%arg0: i32) -> (i32, i32) {
    %c0_i32 = arith.constant 0 : i32
    %c0_i32_0 = arith.constant 0 : i32
    %c0_i32_1 = arith.constant 0 : i32
    return %c0_i32, %c0_i32_0 : i32, i32
  }
  func.func @transform_6(%arg0: i32) -> (i32, i32) {
    %c0_i32 = arith.constant 0 : i32
    %c0_i32_0 = arith.constant 0 : i32
    %c0_i32_1 = arith.constant 0 : i32
    return %c0_i32, %c0_i32_0 : i32, i32
  }
  func.func @transform_7(%arg0: i32) -> (i32, i32) {
    %c0_i32 = arith.constant 0 : i32
    %c0_i32_0 = arith.constant 0 : i32
    %c0_i32_1 = arith.constant 0 : i32
    return %c0_i32, %c0_i32_0 : i32, i32
  }
  func.func @transform_8(%arg0: i32) -> (i32, i32) {
    %c0_i32 = arith.constant 0 : i32
    %c0_i32_0 = arith.constant 0 : i32
    %c0_i32_1 = arith.constant 0 : i32
    return %c0_i32, %c0_i32_0 : i32, i32
  }
  func.func @transform_9(%arg0: i32) -> (i32, i32) {
    %c0_i32 = arith.constant 0 : i32
    %c0_i32_0 = arith.constant 0 : i32
    %c0_i32_1 = arith.constant 0 : i32
    return %c0_i32, %c0_i32_0 : i32, i32
  }
  func.func @transform_10(%arg0: i32) -> (i32, i32) {
    %c0_i32 = arith.constant 0 : i32
    %c0_i32_0 = arith.constant 0 : i32
    %c0_i32_1 = arith.constant 0 : i32
    return %c0_i32, %c0_i32_0 : i32, i32
  }
  func.func @transform_11(%arg0: i32) -> (i32, i32) {
    %c0_i32 = arith.constant 0 : i32
    %c0_i32_0 = arith.constant 0 : i32
    %c0_i32_1 = arith.constant 0 : i32
    return %c0_i32, %c0_i32_0 : i32, i32
  }
  func.func @transform_12(%arg0: i32) -> (i32, i32) {
    %c0_i32 = arith.constant 0 : i32
    %c0_i32_0 = arith.constant 0 : i32
    %c0_i32_1 = arith.constant 0 : i32
    return %c0_i32, %c0_i32_0 : i32, i32
  }
  func.func @transform_13(%arg0: i32) -> (i32, i32) {
    %c0_i32 = arith.constant 0 : i32
    %c0_i32_0 = arith.constant 0 : i32
    %c0_i32_1 = arith.constant 0 : i32
    return %c0_i32, %c0_i32_0 : i32, i32
  }
  func.func @transform_14(%arg0: i32) -> (i32, i32) {
    %c0_i32 = arith.constant 0 : i32
    %c0_i32_0 = arith.constant 0 : i32
    %c0_i32_1 = arith.constant 0 : i32
    return %c0_i32, %c0_i32_0 : i32, i32
  }
  func.func @transform_15(%arg0: i32) -> (i32, i32) {
    %c0_i32 = arith.constant 0 : i32
    %c0_i32_0 = arith.constant 0 : i32
    %c0_i32_1 = arith.constant 0 : i32
    return %c0_i32, %c0_i32_0 : i32, i32
  }
  func.func @transform_16(%arg0: i32) -> (i32, i32) {
    %c0_i32 = arith.constant 0 : i32
    %c0_i32_0 = arith.constant 0 : i32
    %c0_i32_1 = arith.constant 0 : i32
    return %c0_i32, %c0_i32_0 : i32, i32
  }
}

</mosaic_0001>

<llo_original>
// kernel: fused_extract.1
$region0: #{fused_extract.1}
  #allocation0 [shape = 'u32[]', space=smem, size = 0x4, offset = 0x4, fixed_abs, tag = 'smem constant byte address 0x4 - core index']
  #allocation1 [shape = 'u32[144,128]{1,0:T(1,128)}', space=vmem, size = 0x12000, scoped, tag = 'internal scratch']
  #allocation2 [shape = 'f32[1,32]{1,0:T(1,128)}', space=vmem, size = 0x200, scoped, tag = 'scratch operand']
  #allocation3 [shape = 'f32[1,32]{1,0:T(1,128)}', space=vmem, size = 0x200, scoped, tag = 'scratch operand']
  #allocation4 [shape = 'f32[1,32]{1,0:T(1,128)}', space=vmem, size = 0x200, scoped, tag = 'scratch operand']
  #allocation5 [shape = 'f32[1,8]{1,0:T(1,128)}', space=vmem, size = 0x200, scoped, tag = 'scratch operand']
  #allocation6 [shape = 'f32[8,1]{1,0:T(8,128)}', space=vmem, size = 0x1000, scoped, tag = 'scratch operand']
  #allocation7 [shape = 'f32[1,1]{1,0:T(1,128)S(1)}', space=vmem, size = 0x200, scoped, tag = 'scoped memory for fused_extract.1']
  %s0 = inlined_call_operand.hbm [shape: f32[8,32], index: 0, kind: input, shape index: {}]
  %s1 = inlined_call_operand.vmem [shape: f32[1,32], index: 1, kind: input, shape index: {}]
  %s2 = inlined_call_operand.vmem [shape: f32[1,32], index: 2, kind: input, shape index: {}]
  %s3 = inlined_call_operand.vmem [shape: f32[1,32], index: 3, kind: input, shape index: {}]
  %s4 = inlined_call_operand.vmem [shape: f32[1,8], index: 4, kind: input, shape index: {}]
  %s5 = inlined_call_operand.vmem [shape: f32[8,1], index: 5, kind: input, shape index: {}]
  %s6 = inlined_call_operand.vmem [shape: f32[64,128], index: 6, kind: input, shape index: {}]
  %s7 = inlined_call_operand.hbm [shape: f32[1,128], index: 7, kind: input, shape index: {}]
  %s8 = inlined_call_operand.vmem [shape: f32[32,64], index: 8, kind: input, shape index: {}]
  %s9 = inlined_call_operand.vmem [shape: f32[64,32], index: 9, kind: input, shape index: {}]
  %s10 = inlined_call_operand.hbm [shape: f32[1,32], index: 10, kind: input, shape index: {}]
  %s11 = inlined_call_operand.hbm [shape: f32[1,32], index: 11, kind: input, shape index: {}]
  %s12 = inlined_call_operand.hbm [shape: f32[1,128], index: 12, kind: input, shape index: {}]
  %s13 = inlined_call_operand.hbm [shape: f32[1,128], index: 13, kind: input, shape index: {}]
  %s14 = inlined_call_operand.hbm [shape: f32[1,128], index: 14, kind: input, shape index: {}]
  %s15 = inlined_call_operand.<no memory space> [shape: f32[1,1], index: 15, kind: input, shape index: {}]
  %s16 = inlined_call_operand.hbm [shape: f32[3,8], index: 16, kind: output, shape index: {}]
  %s17 = sld [smem:[#allocation0]]
  $region129: #{fused_extract.1} parent=0
    _
  %s19 = ssub.s32 1, %s17
  %s20 = scalar_select 0, %s19, %s17
  %v21 = vstv %s15
  %22 = vst [vmem:[#allocation7] sm:$0x1] %v21
  $region1: #{fused_extract.1} parent=0
    #allocation8 [shape = 'u8[4096]{0}', space=vmem, size = 0x1000, scoped, tag = 'input window, operand 0, single buffered']
    #allocation9 [shape = 's32[2]{0}', space=sflag, size = 0x8, scoped, tag = 'scoped memory for fused_extract.1']
    #allocation10 [shape = 's32[2]{0}', space=sflag, size = 0x8, scoped, tag = 'scoped memory for fused_extract.1']
    #allocation11 [shape = 'u8[512]{0}', space=vmem, size = 0x400, scoped, tag = 'input window, operand 7, single buffered']
    #allocation12 [shape = 's32[1]{0}', space=sflag, size = 0x4, scoped, tag = 'scoped memory for fused_extract.1']
    #allocation13 [shape = 'u8[512]{0}', space=vmem, size = 0x400, scoped, tag = 'input window, operand 10, single buffered']
    #allocation14 [shape = 'u8[512]{0}', space=vmem, size = 0x400, scoped, tag = 'input window, operand 11, single buffered']
    #allocation15 [shape = 's32[1]{0}', space=sflag, size = 0x4, scoped, tag = 'scoped memory for fused_extract.1']
    #allocation16 [shape = 'u8[512]{0}', space=vmem, size = 0x400, scoped, tag = 'input window, operand 12, single buffered']
    #allocation17 [shape = 'u8[512]{0}', space=vmem, size = 0x400, scoped, tag = 'input window, operand 13, single buffered']
    #allocation18 [shape = 's32[1]{0}', space=sflag, size = 0x4, scoped, tag = 'scoped memory for fused_extract.1']
    #allocation19 [shape = 'u8[512]{0}', space=vmem, size = 0x400, scoped, tag = 'input window, operand 14, single buffered']
    #allocation20 [shape = 'u8[2048]{0}', space=vmem, size = 0x800, scoped, tag = 'output window, operand 0, single buffered']
    %23 = vsyncpa [#allocation9], 0
    %24 = vsyncpa [#allocation12], 0
    %25 = vsyncpa [#allocation15], 0
    %26 = vsyncpa [#allocation18], 0
    %27 = vsyncpa [#allocation10], 0
    loop: start=0, step=1, limit=5
    $region2: #{fused_extract.1} parent=1 // loop_pre_header
      _
    $region3: #{fused_extract.1} parent=1 // loop_header
      %s29 = sphi 0, %s33
      %p30 = scmp.ge.s32.totalorder %s29, 5
      %s37 = sphi 0, %s37
      %s39 = sphi 0, %s37
      %s40 = sphi 0, %s39
      %s54 = sphi 0, %s40
      %s58 = sphi 0, %s58
      %s60 = sphi 0, %s58
      %s61 = sphi 0, %s60
      %s75 = sphi 0, %s61
      %s79 = sphi 0, %s79
      %s81 = sphi 0, %s79
      %s82 = sphi 0, %s81
      %s96 = sphi 0, %s82
      %s100 = sphi 0, %s100
      %s102 = sphi 0, %s100
      %s103 = sphi 0, %s102
      %s117 = sphi 0, %s103
      %s121 = sphi 0, %s121
      %s123 = sphi 0, %s121
      %s124 = sphi 0, %s123
      %s138 = sphi 0, %s124
      %s142 = sphi 0, %s142
      %s144 = sphi 0, %s142
      %s145 = sphi 0, %s144
      %s159 = sphi 0, %s145
      %s163 = sphi 0, %s163
      %s165 = sphi 0, %s163
      %s166 = sphi 0, %s165
      %s180 = sphi 0, %s166
      %s184 = sphi 0, %s184
      %s186 = sphi 0, %s184
      %s187 = sphi 0, %s186
      %s201 = sphi 0, %s187
      %s205 = sphi 0, %s205
      %s207 = sphi 0, %s205
      %s208 = sphi 0, %s207
      %s222 = sphi 0, %s208
      %s226 = sphi 0, %s226
      %s228 = sphi 0, %s226
      %s229 = sphi 0, %s228
      %s243 = sphi 0, %s229
      %s247 = sphi 0, %s247
      %s249 = sphi 0, %s247
      %s250 = sphi 0, %s249
      %s264 = sphi 0, %s250
      %s268 = sphi 0, %s268
      %s270 = sphi 0, %s268
      %s271 = sphi 0, %s270
      %s285 = sphi 0, %s271
      %s289 = sphi 0, %s289
      %s291 = sphi 0, %s289
      %s292 = sphi 0, %s291
      %s306 = sphi 0, %s292
      %s310 = sphi 0, %s310
      %s312 = sphi 0, %s310
      %s313 = sphi 0, %s312
      %s327 = sphi 0, %s313
      %s331 = sphi 0, %s331
      %s333 = sphi 0, %s331
      %s334 = sphi 0, %s333
      %s348 = sphi 0, %s334
      %s352 = sphi 0, %s352
      %s354 = sphi 0, %s352
      %s355 = sphi 0, %s354
      %s369 = sphi 0, %s355
      %s373 = sphi 0, %s373
      %s375 = sphi 0, %s373
      %s376 = sphi 0, %s375
      %s390 = sphi 0, %s376
    $region4: #{fused_extract.1} parent=1 // loop_header_branch
      %32 = sbr.rel (%p30) target = $region8
    $region5: #{fused_extract.1} parent=1 // loop_body
      %s34 = ssub.s32 %s29, 1
      %s35 = ssub.s32 %s29, 2
      %s36 = sadd.s32 %s29, 1
      %s38 = sadd.s32 %s37, 1
      %p41 = scmp.eq.s32.totalorder %s29, 2
      %p42 = scmp.ne.s32.totalorder %s37, %s39
      %p43 = scmp.eq.s32.totalorder %s29, 0
      %p44 = por %p42, %p43
      %p45 = scmp.ne.s32.totalorder %s37, %s39
      %p46 = scmp.eq.s32.totalorder %s34, 2
      %p47 = por %p45, %p46
      %p48 = scmp.ne.s32.totalorder %s39, %s40
      %p49 = scmp.eq.s32.totalorder %s34, 0
      %p50 = por %p48, %p49
      %p51 = scmp.ne.s32.totalorder %s39, %s40
      %p52 = scmp.eq.s32.totalorder %s35, 2
      %p53 = por %p51, %p52
      %p55 = scmp.ne.s32.totalorder %s40, %s54
      %p56 = scmp.eq.s32.totalorder %s35, 0
      %p57 = por %p55, %p56
      %s59 = sadd.s32 %s58, 1
      %p62 = scmp.eq.s32.totalorder %s29, 2
      %p63 = scmp.ne.s32.totalorder %s58, %s60
      %p64 = scmp.eq.s32.totalorder %s29, 0
      %p65 = por %p63, %p64
      %p66 = scmp.ne.s32.totalorder %s58, %s60
      %p67 = scmp.eq.s32.totalorder %s34, 2
      %p68 = por %p66, %p67
      %p69 = scmp.ne.s32.totalorder %s60, %s61
      %p70 = scmp.eq.s32.totalorder %s34, 0
      %p71 = por %p69, %p70
      %p72 = scmp.ne.s32.totalorder %s60, %s61
      %p73 = scmp.eq.s32.totalorder %s35, 2
      %p74 = por %p72, %p73
      %p76 = scmp.ne.s32.totalorder %s61, %s75
      %p77 = scmp.eq.s32.totalorder %s35, 0
      %p78 = por %p76, %p77
      %s80 = sadd.s32 %s79, 1
      %p83 = scmp.eq.s32.totalorder %s29, 2
      %p84 = scmp.ne.s32.totalorder %s79, %s81
      %p85 = scmp.eq.s32.totalorder %s29, 0
      %p86 = por %p84, %p85
      %p87 = scmp.ne.s32.totalorder %s79, %s81
      %p88 = scmp.eq.s32.totalorder %s34, 2
      %p89 = por %p87, %p88
      %p90 = scmp.ne.s32.totalorder %s81, %s82
      %p91 = scmp.eq.s32.totalorder %s34, 0
      %p92 = por %p90, %p91
      %p93 = scmp.ne.s32.totalorder %s81, %s82
      %p94 = scmp.eq.s32.totalorder %s35, 2
      %p95 = por %p93, %p94
      %p97 = scmp.ne.s32.totalorder %s82, %s96
      %p98 = scmp.eq.s32.totalorder %s35, 0
      %p99 = por %p97, %p98
      %s101 = sadd.s32 %s100, 1
      %p104 = scmp.eq.s32.totalorder %s29, 2
      %p105 = scmp.ne.s32.totalorder %s100, %s102
      %p106 = scmp.eq.s32.totalorder %s29, 0
      %p107 = por %p105, %p106
      %p108 = scmp.ne.s32.totalorder %s100, %s102
      %p109 = scmp.eq.s32.totalorder %s34, 2
      %p110 = por %p108, %p109
      %p111 = scmp.ne.s32.totalorder %s102, %s103
      %p112 = scmp.eq.s32.totalorder %s34, 0
      %p113 = por %p111, %p112
      %p114 = scmp.ne.s32.totalorder %s102, %s103
      %p115 = scmp.eq.s32.totalorder %s35, 2
      %p116 = por %p114, %p115
      %p118 = scmp.ne.s32.totalorder %s103, %s117
      %p119 = scmp.eq.s32.totalorder %s35, 0
      %p120 = por %p118, %p119
      %s122 = sadd.s32 %s121, 1
      %p125 = scmp.eq.s32.totalorder %s29, 2
      %p126 = scmp.ne.s32.totalorder %s121, %s123
      %p127 = scmp.eq.s32.totalorder %s29, 0
      %p128 = por %p126, %p127
      %p129 = scmp.ne.s32.totalorder %s121, %s123
      %p130 = scmp.eq.s32.totalorder %s34, 2
      %p131 = por %p129, %p130
      %p132 = scmp.ne.s32.totalorder %s123, %s124
      %p133 = scmp.eq.s32.totalorder %s34, 0
      %p134 = por %p132, %p133
      %p135 = scmp.ne.s32.totalorder %s123, %s124
      %p136 = scmp.eq.s32.totalorder %s35, 2
      %p137 = por %p135, %p136
      %p139 = scmp.ne.s32.totalorder %s124, %s138
      %p140 = scmp.eq.s32.totalorder %s35, 0
      %p141 = por %p139, %p140
      %s143 = sadd.s32 %s142, 1
      %p146 = scmp.eq.s32.totalorder %s29, 2
      %p147 = scmp.ne.s32.totalorder %s142, %s144
      %p148 = scmp.eq.s32.totalorder %s29, 0
      %p149 = por %p147, %p148
      %p150 = scmp.ne.s32.totalorder %s142, %s144
      %p151 = scmp.eq.s32.totalorder %s34, 2
      %p152 = por %p150, %p151
      %p153 = scmp.ne.s32.totalorder %s144, %s145
      %p154 = scmp.eq.s32.totalorder %s34, 0
      %p155 = por %p153, %p154
      %p156 = scmp.ne.s32.totalorder %s144, %s145
      %p157 = scmp.eq.s32.totalorder %s35, 2
      %p158 = por %p156, %p157
      %p160 = scmp.ne.s32.totalorder %s145, %s159
      %p161 = scmp.eq.s32.totalorder %s35, 0
      %p162 = por %p160, %p161
      %s164 = sadd.s32 %s163, 1
      %p167 = scmp.eq.s32.totalorder %s29, 2
      %p168 = scmp.ne.s32.totalorder %s163, %s165
      %p169 = scmp.eq.s32.totalorder %s29, 0
      %p170 = por %p168, %p169
      %p171 = scmp.ne.s32.totalorder %s163, %s165
      %p172 = scmp.eq.s32.totalorder %s34, 2
      %p173 = por %p171, %p172
      %p174 = scmp.ne.s32.totalorder %s165, %s166
      %p175 = scmp.eq.s32.totalorder %s34, 0
      %p176 = por %p174, %p175
      %p177 = scmp.ne.s32.totalorder %s165, %s166
      %p178 = scmp.eq.s32.totalorder %s35, 2
      %p179 = por %p177, %p178
      %p181 = scmp.ne.s32.totalorder %s166, %s180
      %p182 = scmp.eq.s32.totalorder %s35, 0
      %p183 = por %p181, %p182
      %s185 = sadd.s32 %s184, 1
      %p188 = scmp.eq.s32.totalorder %s29, 2
      %p189 = scmp.ne.s32.totalorder %s184, %s186
      %p190 = scmp.eq.s32.totalorder %s29, 0
      %p191 = por %p189, %p190
      %p192 = scmp.ne.s32.totalorder %s184, %s186
      %p193 = scmp.eq.s32.totalorder %s34, 2
      %p194 = por %p192, %p193
      %p195 = scmp.ne.s32.totalorder %s186, %s187
      %p196 = scmp.eq.s32.totalorder %s34, 0
      %p197 = por %p195, %p196
      %p198 = scmp.ne.s32.totalorder %s186, %s187
      %p199 = scmp.eq.s32.totalorder %s35, 2
      %p200 = por %p198, %p199
      %p202 = scmp.ne.s32.totalorder %s187, %s201
      %p203 = scmp.eq.s32.totalorder %s35, 0
      %p204 = por %p202, %p203
      %s206 = sadd.s32 %s205, 1
      %p209 = scmp.eq.s32.totalorder %s29, 2
      %p210 = scmp.ne.s32.totalorder %s205, %s207
      %p211 = scmp.eq.s32.totalorder %s29, 0
      %p212 = por %p210, %p211
      %p213 = scmp.ne.s32.totalorder %s205, %s207
      %p214 = scmp.eq.s32.totalorder %s34, 2
      %p215 = por %p213, %p214
      %p216 = scmp.ne.s32.totalorder %s207, %s208
      %p217 = scmp.eq.s32.totalorder %s34, 0
      %p218 = por %p216, %p217
      %p219 = scmp.ne.s32.totalorder %s207, %s208
      %p220 = scmp.eq.s32.totalorder %s35, 2
      %p221 = por %p219, %p220
      %p223 = scmp.ne.s32.totalorder %s208, %s222
      %p224 = scmp.eq.s32.totalorder %s35, 0
      %p225 = por %p223, %p224
      %s227 = sadd.s32 %s226, 1
      %p230 = scmp.eq.s32.totalorder %s29, 2
      %p231 = scmp.ne.s32.totalorder %s226, %s228
      %p232 = scmp.eq.s32.totalorder %s29, 0
      %p233 = por %p231, %p232
      %p234 = scmp.ne.s32.totalorder %s226, %s228
      %p235 = scmp.eq.s32.totalorder %s34, 2
      %p236 = por %p234, %p235
      %p237 = scmp.ne.s32.totalorder %s228, %s229
      %p238 = scmp.eq.s32.totalorder %s34, 0
      %p239 = por %p237, %p238
      %p240 = scmp.ne.s32.totalorder %s228, %s229
      %p241 = scmp.eq.s32.totalorder %s35, 2
      %p242 = por %p240, %p241
      %p244 = scmp.ne.s32.totalorder %s229, %s243
      %p245 = scmp.eq.s32.totalorder %s35, 0
      %p246 = por %p244, %p245
      %s248 = sadd.s32 %s247, 1
      %p251 = scmp.eq.s32.totalorder %s29, 2
      %p252 = scmp.ne.s32.totalorder %s247, %s249
      %p253 = scmp.eq.s32.totalorder %s29, 0
      %p254 = por %p252, %p253
      %p255 = scmp.ne.s32.totalorder %s247, %s249
      %p256 = scmp.eq.s32.totalorder %s34, 2
      %p257 = por %p255, %p256
      %p258 = scmp.ne.s32.totalorder %s249, %s250
      %p259 = scmp.eq.s32.totalorder %s34, 0
      %p260 = por %p258, %p259
      %p261 = scmp.ne.s32.totalorder %s249, %s250
      %p262 = scmp.eq.s32.totalorder %s35, 2
      %p263 = por %p261, %p262
      %p265 = scmp.ne.s32.totalorder %s250, %s264
      %p266 = scmp.eq.s32.totalorder %s35, 0
      %p267 = por %p265, %p266
      %s269 = sadd.s32 %s268, 1
      %p272 = scmp.eq.s32.totalorder %s29, 2
      %p273 = scmp.ne.s32.totalorder %s268, %s270
      %p274 = scmp.eq.s32.totalorder %s29, 0
      %p275 = por %p273, %p274
      %p276 = scmp.ne.s32.totalorder %s268, %s270
      %p277 = scmp.eq.s32.totalorder %s34, 2
      %p278 = por %p276, %p277
      %p279 = scmp.ne.s32.totalorder %s270, %s271
      %p280 = scmp.eq.s32.totalorder %s34, 0
      %p281 = por %p279, %p280
      %p282 = scmp.ne.s32.totalorder %s270, %s271
      %p283 = scmp.eq.s32.totalorder %s35, 2
      %p284 = por %p282, %p283
      %p286 = scmp.ne.s32.totalorder %s271, %s285
      %p287 = scmp.eq.s32.totalorder %s35, 0
      %p288 = por %p286, %p287
      %s290 = sadd.s32 %s289, 1
      %p293 = scmp.eq.s32.totalorder %s29, 2
      %p294 = scmp.ne.s32.totalorder %s289, %s291
      %p295 = scmp.eq.s32.totalorder %s29, 0
      %p296 = por %p294, %p295
      %p297 = scmp.ne.s32.totalorder %s289, %s291
      %p298 = scmp.eq.s32.totalorder %s34, 2
      %p299 = por %p297, %p298
      %p300 = scmp.ne.s32.totalorder %s291, %s292
      %p301 = scmp.eq.s32.totalorder %s34, 0
      %p302 = por %p300, %p301
      %p303 = scmp.ne.s32.totalorder %s291, %s292
      %p304 = scmp.eq.s32.totalorder %s35, 2
      %p305 = por %p303, %p304
      %p307 = scmp.ne.s32.totalorder %s292, %s306
      %p308 = scmp.eq.s32.totalorder %s35, 0
      %p309 = por %p307, %p308
      %s311 = sadd.s32 %s310, 1
      %p314 = scmp.eq.s32.totalorder %s29, 2
      %p315 = scmp.ne.s32.totalorder %s310, %s312
      %p316 = scmp.eq.s32.totalorder %s29, 0
      %p317 = por %p315, %p316
      %p318 = scmp.ne.s32.totalorder %s310, %s312
      %p319 = scmp.eq.s32.totalorder %s34, 2
      %p320 = por %p318, %p319
      %p321 = scmp.ne.s32.totalorder %s312, %s313
      %p322 = scmp.eq.s32.totalorder %s34, 0
      %p323 = por %p321, %p322
      %p324 = scmp.ne.s32.totalorder %s312, %s313
      %p325 = scmp.eq.s32.totalorder %s35, 2
      %p326 = por %p324, %p325
      %p328 = scmp.ne.s32.totalorder %s313, %s327
      %p329 = scmp.eq.s32.totalorder %s35, 0
      %p330 = por %p328, %p329
      %s332 = sadd.s32 %s331, 1
      %p335 = scmp.eq.s32.totalorder %s29, 2
      %p336 = scmp.ne.s32.totalorder %s331, %s333
      %p337 = scmp.eq.s32.totalorder %s29, 0
      %p338 = por %p336, %p337
      %p339 = scmp.ne.s32.totalorder %s331, %s333
      %p340 = scmp.eq.s32.totalorder %s34, 2
      %p341 = por %p339, %p340
      %p342 = scmp.ne.s32.totalorder %s333, %s334
      %p343 = scmp.eq.s32.totalorder %s34, 0
      %p344 = por %p342, %p343
      %p345 = scmp.ne.s32.totalorder %s333, %s334
      %p346 = scmp.eq.s32.totalorder %s35, 2
      %p347 = por %p345, %p346
      %p349 = scmp.ne.s32.totalorder %s334, %s348
      %p350 = scmp.eq.s32.totalorder %s35, 0
      %p351 = por %p349, %p350
      %s353 = sadd.s32 %s352, 1
      %p356 = scmp.eq.s32.totalorder %s29, 2
      %p357 = scmp.ne.s32.totalorder %s352, %s354
      %p358 = scmp.eq.s32.totalorder %s29, 0
      %p359 = por %p357, %p358
      %p360 = scmp.ne.s32.totalorder %s352, %s354
      %p361 = scmp.eq.s32.totalorder %s34, 2
      %p362 = por %p360, %p361
      %p363 = scmp.ne.s32.totalorder %s354, %s355
      %p364 = scmp.eq.s32.totalorder %s34, 0
      %p365 = por %p363, %p364
      %p366 = scmp.ne.s32.totalorder %s354, %s355
      %p367 = scmp.eq.s32.totalorder %s35, 2
      %p368 = por %p366, %p367
      %p370 = scmp.ne.s32.totalorder %s355, %s369
      %p371 = scmp.eq.s32.totalorder %s35, 0
      %p372 = por %p370, %p371
      %s374 = sadd.s32 %s373, 1
      %p377 = scmp.eq.s32.totalorder %s29, 2
      %p378 = scmp.ne.s32.totalorder %s373, %s375
      %p379 = scmp.eq.s32.totalorder %s29, 0
      %p380 = por %p378, %p379
      %p381 = scmp.ne.s32.totalorder %s373, %s375
      %p382 = scmp.eq.s32.totalorder %s34, 2
      %p383 = por %p381, %p382
      %p384 = scmp.ne.s32.totalorder %s375, %s376
      %p385 = scmp.eq.s32.totalorder %s34, 0
      %p386 = por %p384, %p385
      %p387 = scmp.ne.s32.totalorder %s375, %s376
      %p388 = scmp.eq.s32.totalorder %s35, 2
      %p389 = por %p387, %p388
      %p391 = scmp.ne.s32.totalorder %s376, %s390
      %p392 = scmp.eq.s32.totalorder %s35, 0
      %p393 = por %p391, %p392
      %p394 = scmp.le.s32.totalorder 1, %s29
      %p395 = scmp.lt.s32.totalorder %s29, 4
      %p396 = pnand %p394, %p395
      %p397 = pneg %p396
      // Predicated region
      $region9: #{fused_extract.1} parent=5 // pred_check
        _
      $region10: #{fused_extract.1} parent=5 // pred_check_branch
        %399 = sbr.rel (%p396) target = $region12
      $region11: #{fused_extract.1} parent=5 // pred_region
        %s400 = ssub.s32 %s29, 1
        // Predicated region
        $region13: #{fused_extract.1} parent=11 // pred_check
          %p401 = pneg %p50
        $region14: #{fused_extract.1} parent=11 // pred_check_branch
          %403 = sbr.rel (%p401) target = $region16
        $region15: #{fused_extract.1} parent=11 // pred_region
          %s405 = ssub.s32 128, 128
          %406 = vsyncadd [#allocation9], %s405
          %s408 = sshll.u32 [#allocation8], 4
          %s409 = int_to_ptr.vmem [resolvable:$true] %s408
          %411 = dma.hbm_to_vmem [thread:$0]  %s0, 128, %s409, [#allocation9]
        $region16: #{fused_extract.1} parent=11 // pred_fallthru
          _
        // Predicated region
        $region17: #{fused_extract.1} parent=11 // pred_check
          %p412 = pneg %p71
        $region18: #{fused_extract.1} parent=11 // pred_check_branch
          %414 = sbr.rel (%p412) target = $region20
        $region19: #{fused_extract.1} parent=11 // pred_region
          _
        $region20: #{fused_extract.1} parent=11 // pred_fallthru
          _
        // Predicated region
        $region21: #{fused_extract.1} parent=11 // pred_check
          %p415 = pneg %p92
        $region22: #{fused_extract.1} parent=11 // pred_check_branch
          %417 = sbr.rel (%p415) target = $region24
        $region23: #{fused_extract.1} parent=11 // pred_region
          _
        $region24: #{fused_extract.1} parent=11 // pred_fallthru
          _
        // Predicated region
        $region25: #{fused_extract.1} parent=11 // pred_check
          %p418 = pneg %p113
        $region26: #{fused_extract.1} parent=11 // pred_check_branch
          %420 = sbr.rel (%p418) target = $region28
        $region27: #{fused_extract.1} parent=11 // pred_region
          _
        $region28: #{fused_extract.1} parent=11 // pred_fallthru
          _
        // Predicated region
        $region29: #{fused_extract.1} parent=11 // pred_check
          %p421 = pneg %p134
        $region30: #{fused_extract.1} parent=11 // pred_check_branch
          %423 = sbr.rel (%p421) target = $region32
        $region31: #{fused_extract.1} parent=11 // pred_region
          _
        $region32: #{fused_extract.1} parent=11 // pred_fallthru
          _
        // Predicated region
        $region33: #{fused_extract.1} parent=11 // pred_check
          %p424 = pneg %p155
        $region34: #{fused_extract.1} parent=11 // pred_check_branch
          %426 = sbr.rel (%p424) target = $region36
        $region35: #{fused_extract.1} parent=11 // pred_region
          _
        $region36: #{fused_extract.1} parent=11 // pred_fallthru
          _
        // Predicated region
        $region37: #{fused_extract.1} parent=11 // pred_check
          %p427 = pneg %p176
        $region38: #{fused_extract.1} parent=11 // pred_check_branch
          %429 = sbr.rel (%p427) target = $region40
        $region39: #{fused_extract.1} parent=11 // pred_region
          _
        $region40: #{fused_extract.1} parent=11 // pred_fallthru
          _
        // Predicated region
        $region41: #{fused_extract.1} parent=11 // pred_check
          %p430 = pneg %p197
        $region42: #{fused_extract.1} parent=11 // pred_check_branch
          %432 = sbr.rel (%p430) target = $region44
        $region43: #{fused_extract.1} parent=11 // pred_region
          %s434 = ssub.s32 16, 16
          %435 = vsyncadd [#allocation12], %s434
          %s437 = sshll.u32 [#allocation11], 4
          %s438 = int_to_ptr.vmem [resolvable:$true] %s437
          %440 = dma.hbm_to_vmem [thread:$0]  %s7, 16, %s438, [#allocation12]
        $region44: #{fused_extract.1} parent=11 // pred_fallthru
          _
        // Predicated region
        $region45: #{fused_extract.1} parent=11 // pred_check
          %p441 = pneg %p218
        $region46: #{fused_extract.1} parent=11 // pred_check_branch
          %443 = sbr.rel (%p441) target = $region48
        $region47: #{fused_extract.1} parent=11 // pred_region
          _
        $region48: #{fused_extract.1} parent=11 // pred_fallthru
          _
        // Predicated region
        $region49: #{fused_extract.1} parent=11 // pred_check
          %p444 = pneg %p239
        $region50: #{fused_extract.1} parent=11 // pred_check_branch
          %446 = sbr.rel (%p444) target = $region52
        $region51: #{fused_extract.1} parent=11 // pred_region
          _
        $region52: #{fused_extract.1} parent=11 // pred_fallthru
          _
        // Predicated region
        $region53: #{fused_extract.1} parent=11 // pred_check
          %p447 = pneg %p260
        $region54: #{fused_extract.1} parent=11 // pred_check_branch
          %449 = sbr.rel (%p447) target = $region56
        $region55: #{fused_extract.1} parent=11 // pred_region
          %s451 = ssub.s32 16, 16
          %452 = vsyncadd [#allocation12], %s451
          %s454 = sshll.u32 [#allocation13], 4
          %s455 = int_to_ptr.vmem [resolvable:$true] %s454
          %457 = dma.hbm_to_vmem [thread:$0]  %s10, 16, %s455, [#allocation12]
        $region56: #{fused_extract.1} parent=11 // pred_fallthru
          _
        // Predicated region
        $region57: #{fused_extract.1} parent=11 // pred_check
          %p458 = pneg %p281
        $region58: #{fused_extract.1} parent=11 // pred_check_branch
          %460 = sbr.rel (%p458) target = $region60
        $region59: #{fused_extract.1} parent=11 // pred_region
          %s462 = ssub.s32 16, 16
          %463 = vsyncadd [#allocation15], %s462
          %s465 = sshll.u32 [#allocation14], 4
          %s466 = int_to_ptr.vmem [resolvable:$true] %s465
          %468 = dma.hbm_to_vmem [thread:$0]  %s11, 16, %s466, [#allocation15]
        $region60: #{fused_extract.1} parent=11 // pred_fallthru
          _
        // Predicated region
        $region61: #{fused_extract.1} parent=11 // pred_check
          %p469 = pneg %p302
        $region62: #{fused_extract.1} parent=11 // pred_check_branch
          %471 = sbr.rel (%p469) target = $region64
        $region63: #{fused_extract.1} parent=11 // pred_region
          %s473 = ssub.s32 16, 16
          %474 = vsyncadd [#allocation15], %s473
          %s476 = sshll.u32 [#allocation16], 4
          %s477 = int_to_ptr.vmem [resolvable:$true] %s476
          %479 = dma.hbm_to_vmem [thread:$0]  %s12, 16, %s477, [#allocation15]
        $region64: #{fused_extract.1} parent=11 // pred_fallthru
          _
        // Predicated region
        $region65: #{fused_extract.1} parent=11 // pred_check
          %p480 = pneg %p323
        $region66: #{fused_extract.1} parent=11 // pred_check_branch
          %482 = sbr.rel (%p480) target = $region68
        $region67: #{fused_extract.1} parent=11 // pred_region
          %s484 = ssub.s32 16, 16
          %485 = vsyncadd [#allocation18], %s484
          %s487 = sshll.u32 [#allocation17], 4
          %s488 = int_to_ptr.vmem [resolvable:$true] %s487
          %490 = dma.hbm_to_vmem [thread:$0]  %s13, 16, %s488, [#allocation18]
        $region68: #{fused_extract.1} parent=11 // pred_fallthru
          _
        // Predicated region
        $region69: #{fused_extract.1} parent=11 // pred_check
          %p491 = pneg %p344
        $region70: #{fused_extract.1} parent=11 // pred_check_branch
          %493 = sbr.rel (%p491) target = $region72
        $region71: #{fused_extract.1} parent=11 // pred_region
          %s495 = ssub.s32 16, 16
          %496 = vsyncadd [#allocation18], %s495
          %s498 = sshll.u32 [#allocation19], 4
          %s499 = int_to_ptr.vmem [resolvable:$true] %s498
          %501 = dma.hbm_to_vmem [thread:$0]  %s14, 16, %s499, [#allocation18]
        $region72: #{fused_extract.1} parent=11 // pred_fallthru
          _
        // Predicated region
        $region73: #{fused_extract.1} parent=11 // pred_check
          %p502 = pneg %p365
        $region74: #{fused_extract.1} parent=11 // pred_check_branch
          %504 = sbr.rel (%p502) target = $region76
        $region75: #{fused_extract.1} parent=11 // pred_region
          _
        $region76: #{fused_extract.1} parent=11 // pred_fallthru
          _
      $region12: #{fused_extract.1} parent=5 // pred_fallthru
        _
      %p505 = scmp.lt.s32.totalorder %s29, 3
      // Predicated region
      $region77: #{fused_extract.1} parent=5 // pred_check
        %p506 = pneg %p505
      $region78: #{fused_extract.1} parent=5 // pred_check_branch
        %508 = sbr.rel (%p506) target = $region80
      $region79: #{fused_extract.1} parent=5 // pred_region
        _
      $region80: #{fused_extract.1} parent=5 // pred_fallthru
        _
      %p509 = scmp.le.s32.totalorder 1, %s29
      %p510 = scmp.lt.s32.totalorder %s29, 4
      %p511 = pnand %p509, %p510
      %p512 = pneg %p511
      // Predicated region
      $region81: #{fused_extract.1} parent=5 // pred_check
        _
      $region82: #{fused_extract.1} parent=5 // pred_check_branch
        %514 = sbr.rel (%p511) target = $region84
      $region83: #{fused_extract.1} parent=5 // pred_region
        %s515 = ssub.s32 %s29, 1
        // Predicated region
        $region85: #{fused_extract.1} parent=83 // pred_check
          %p516 = pneg %p50
        $region86: #{fused_extract.1} parent=83 // pred_check_branch
          %518 = sbr.rel (%p516) target = $region88
        $region87: #{fused_extract.1} parent=83 // pred_region
          %519 = dma.done [#allocation9], 128
        $region88: #{fused_extract.1} parent=83 // pred_fallthru
          _
        // Predicated region
        $region89: #{fused_extract.1} parent=83 // pred_check
          %p520 = pneg %p197
        $region90: #{fused_extract.1} parent=83 // pred_check_branch
          %522 = sbr.rel (%p520) target = $region92
        $region91: #{fused_extract.1} parent=83 // pred_region
          %523 = dma.done [#allocation12], 16
        $region92: #{fused_extract.1} parent=83 // pred_fallthru
          _
        // Predicated region
        $region93: #{fused_extract.1} parent=83 // pred_check
          %p524 = pneg %p260
        $region94: #{fused_extract.1} parent=83 // pred_check_branch
          %526 = sbr.rel (%p524) target = $region96
        $region95: #{fused_extract.1} parent=83 // pred_region
          %527 = dma.done [#allocation12], 16
        $region96: #{fused_extract.1} parent=83 // pred_fallthru
          _
        // Predicated region
        $region97: #{fused_extract.1} parent=83 // pred_check
          %p528 = pneg %p281
        $region98: #{fused_extract.1} parent=83 // pred_check_branch
          %530 = sbr.rel (%p528) target = $region100
        $region99: #{fused_extract.1} parent=83 // pred_region
          %531 = dma.done [#allocation15], 16
        $region100: #{fused_extract.1} parent=83 // pred_fallthru
          _
        // Predicated region
        $region101: #{fused_extract.1} parent=83 // pred_check
          %p532 = pneg %p302
        $region102: #{fused_extract.1} parent=83 // pred_check_branch
          %534 = sbr.rel (%p532) target = $region104
        $region103: #{fused_extract.1} parent=83 // pred_region
          %535 = dma.done [#allocation15], 16
        $region104: #{fused_extract.1} parent=83 // pred_fallthru
          _
        // Predicated region
        $region105: #{fused_extract.1} parent=83 // pred_check
          %p536 = pneg %p323
        $region106: #{fused_extract.1} parent=83 // pred_check_branch
          %538 = sbr.rel (%p536) target = $region108
        $region107: #{fused_extract.1} parent=83 // pred_region
          %539 = dma.done [#allocation18], 16
        $region108: #{fused_extract.1} parent=83 // pred_fallthru
          _
        // Predicated region
        $region109: #{fused_extract.1} parent=83 // pred_check
          %p540 = pneg %p344
        $region110: #{fused_extract.1} parent=83 // pred_check_branch
          %542 = sbr.rel (%p540) target = $region112
        $region111: #{fused_extract.1} parent=83 // pred_region
          %543 = dma.done [#allocation18], 16
        $region112: #{fused_extract.1} parent=83 // pred_fallthru
          _
        %p544 = pneg %p50
        %p545 = pneg %p47
        %p546 = pneg %p71
        %p547 = pneg %p68
        %p548 = pneg %p92
        %p549 = pneg %p89
        %p550 = pneg %p113
        %p551 = pneg %p110
        %p552 = pneg %p134
        %p553 = pneg %p131
        %p554 = pneg %p155
        %p555 = pneg %p152
        %p556 = pneg %p176
        %p557 = pneg %p173
        %p558 = pneg %p197
        %p559 = pneg %p194
        %p560 = pneg %p218
        %p561 = pneg %p215
        %p562 = pneg %p239
        %p563 = pneg %p236
        %p564 = pneg %p260
        %p565 = pneg %p257
        %p566 = pneg %p281
        %p567 = pneg %p278
        %p568 = pneg %p302
        %p569 = pneg %p299
        %p570 = pneg %p323
        %p571 = pneg %p320
        %p572 = pneg %p344
        %p573 = pneg %p341
        %p574 = pneg %p365
        %p575 = pneg %p362
        %p576 = pneg %p386
        %p577 = pneg %p383
        %p578 = scmp.eq.s32.totalorder %s34, 0
        // Predicated region
        $region113: #{fused_extract.1} parent=83 // pred_check
          %p579 = pneg %p578
        $region114: #{fused_extract.1} parent=83 // pred_check_branch
          %581 = sbr.rel (%p579) target = $region116
        $region115: #{fused_extract.1} parent=83 // pred_region
          %v582 = vld [vmem:[%s1] sm:$0x1]
          %vm583 = vcmask 253952
          %584 = vst.msk [vmem:[#allocation2] sm:$0x1] %vm583, %v582
          %v585 = vld [vmem:[%s2] sm:$0x1]
          %586 = vst.msk [vmem:[#allocation3] sm:$0x1] %vm583, %v585
          %v587 = vld [vmem:[%s3] sm:$0x1]
          %588 = vst.msk [vmem:[#allocation4] sm:$0x1] %vm583, %v587
          %v589 = vld [vmem:[%s4] sm:$0x1]
          %vm590 = vcmask 57344
          %591 = vst.msk [vmem:[#allocation5] sm:$0x1] %vm590, %v589
          %v592 = vld [vmem:[%s5] sm:$0xff]
          %vm593 = vcmask 7168
          %594 = vst.msk [vmem:[#allocation6] sm:$0xff] %vm593, %v592
          %vm595 = vcmask 59392
          %596 = vst.msk [vmem:[#allocation20] sm:$0x7] %vm595, 0.0
        $region116: #{fused_extract.1} parent=83 // pred_fallthru
          _
        %v597 = vld [vmem:[#allocation4] sm:$0x1]
        %v598 = vld [vmem:[#allocation2] sm:$0x1]
        %v599 = vld [vmem:[#allocation3] sm:$0x1]
        %v600 = vld [vmem:[#allocation5] sm:$0x1]
        %v601 = vld [vmem:[#allocation6] sm:$0xff]
        %v602 = vld [vmem:[%s6] sm:$0xff]
        %v603 = vld [vmem:[%s6 + $0x8] sm:$0xff]
        %v604 = vld [vmem:[%s6 + $0x10] sm:$0xff]
        %v605 = vld [vmem:[%s6 + $0x18] sm:$0xff]
        %v606 = vld [vmem:[%s6 + $0x20] sm:$0xff]
        %v607 = vld [vmem:[%s6 + $0x28] sm:$0xff]
        %v608 = vld [vmem:[%s6 + $0x30] sm:$0xff]
        %v609 = vld [vmem:[%s6 + $0x38] sm:$0xff]
        %vm610 = vcmask 261120
        %v612 = vsel %vm610, %v598, 0
        %614 = vmatprep.subr.mxu0 0.0
        %615 = vmatpush1.msra.mxu0 0.0
        %616 = vmatprep.subr.mxu0 0.0
        %617 = vmatpush1.msra.mxu0 0.0
        %618 = vmatprep.subr.mxu0 0.0
        %619 = vmatpush1.msra.mxu0 0.0
        %620 = vmatprep.subr.mxu0 0.0
        %621 = vmatpush1.msra.mxu0 0.0
        %622 = vmatprep.subr.mxu0 0.0
        %623 = vmatpush1.msra.mxu0 0.0
        %624 = vmatprep.subr.mxu0 0.0
        %625 = vmatpush1.msra.mxu0 0.0
        %626 = vmatprep.subr.mxu0 0.0
        %627 = vmatpush1.msra.mxu0 0.0
        %628 = vmatprep.subr.mxu0 0.0
        %629 = vmatpush1.msra.mxu0 0.0
        %630 = vmatprep.subr.mxu0 0.0
        %631 = vmatpush1.msra.mxu0 0.0
        %632 = vmatprep.subr.mxu0 0.0
        %633 = vmatpush1.msra.mxu0 0.0
        %634 = vmatprep.subr.mxu0 0.0
        %635 = vmatpush1.msra.mxu0 0.0
        %636 = vmatprep.subr.mxu0 0.0
        %637 = vmatpush1.msra.mxu0 0.0
        %638 = vmatprep.subr.mxu0 0.0
        %639 = vmatpush1.msra.mxu0 %v609
        %640 = vmatprep.subr.mxu0 0.0
        %641 = vmatpush1.msra.mxu0 %v608
        %642 = vmatprep.subr.mxu0 0.0
        %643 = vmatpush1.msra.mxu0 %v607
        %644 = vmatprep.subr.mxu0 0.0
        %645 = vmatpush1.msra.mxu0 %v606
        %646 = vmatprep.subr.mxu0 0.0
        %647 = vmatpush2.msra.mxu0 0.0
        %648 = vmatprep.subr.mxu0 0.0
        %649 = vmatpush2.msra.mxu0 0.0
        %650 = vmatprep.subr.mxu0 0.0
        %651 = vmatpush2.msra.mxu0 0.0
        %652 = vmatprep.subr.mxu0 0.0
        %653 = vmatpush2.msra.mxu0 0.0
        %654 = vmatprep.subr.mxu0 0.0
        %655 = vmatpush2.msra.mxu0 0.0
        %656 = vmatprep.subr.mxu0 0.0
        %657 = vmatpush2.msra.mxu0 0.0
        %658 = vmatprep.subr.mxu0 0.0
        %659 = vmatpush2.msra.mxu0 0.0
        %660 = vmatprep.subr.mxu0 0.0
        %661 = vmatpush2.msra.mxu0 0.0
        %662 = vmatprep.subr.mxu0 0.0
        %663 = vmatpush2.msra.mxu0 0.0
        %664 = vmatprep.subr.mxu0 0.0
        %665 = vmatpush2.msra.mxu0 0.0
        %666 = vmatprep.subr.mxu0 0.0
        %667 = vmatpush2.msra.mxu0 0.0
        %668 = vmatprep.subr.mxu0 0.0
        %669 = vmatpush2.msra.mxu0 0.0
        %670 = vmatprep.subr.mxu0 0.0
        %671 = vmatpush2.msra.mxu0 0.0
        %672 = vmatprep.subr.mxu0 0.0
        %673 = vmatpush2.msra.mxu0 0.0
        %674 = vmatprep.subr.mxu0 0.0
        %675 = vmatpush2.msra.mxu0 0.0
        %676 = vmatprep.subr.mxu0 0.0
        %677 = vmatpush2.msra.mxu0 0.0
        %678 = vmatprep.mubr.f32.mxu0 0.0
        %679 = vmatmul.mubr.f32.gmra.mxu0 %v612
        %v680 = vpop.f32.mrf.mxu0
        %v681 = vadd.f32 0.0, %v680
        %v682 = vpop.f32.mrf.mxu0
        %683 = vdwg.mxu0
        %v685 = vsel %vm610, %v597, 0
        %687 = vmatprep.subr.mxu0 0.0
        %688 = vmatpush1.msra.mxu0 0.0
        %689 = vmatprep.subr.mxu0 0.0
        %690 = vmatpush1.msra.mxu0 0.0
        %691 = vmatprep.subr.mxu0 0.0
        %692 = vmatpush1.msra.mxu0 0.0
        %693 = vmatprep.subr.mxu0 0.0
        %694 = vmatpush1.msra.mxu0 0.0
        %695 = vmatprep.subr.mxu0 0.0
        %696 = vmatpush1.msra.mxu0 0.0
        %697 = vmatprep.subr.mxu0 0.0
        %698 = vmatpush1.msra.mxu0 0.0
        %699 = vmatprep.subr.mxu0 0.0
        %700 = vmatpush1.msra.mxu0 0.0
        %701 = vmatprep.subr.mxu0 0.0
        %702 = vmatpush1.msra.mxu0 0.0
        %703 = vmatprep.subr.mxu0 0.0
        %704 = vmatpush1.msra.mxu0 0.0
        %705 = vmatprep.subr.mxu0 0.0
        %706 = vmatpush1.msra.mxu0 0.0
        %707 = vmatprep.subr.mxu0 0.0
        %708 = vmatpush1.msra.mxu0 0.0
        %709 = vmatprep.subr.mxu0 0.0
        %710 = vmatpush1.msra.mxu0 0.0
        %711 = vmatprep.subr.mxu0 0.0
        %712 = vmatpush1.msra.mxu0 %v605
        %713 = vmatprep.subr.mxu0 0.0
        %714 = vmatpush1.msra.mxu0 %v604
        %715 = vmatprep.subr.mxu0 0.0
        %716 = vmatpush1.msra.mxu0 %v603
        %717 = vmatprep.subr.mxu0 0.0
        %718 = vmatpush1.msra.mxu0 %v602
        %719 = vmatprep.subr.mxu0 0.0
        %720 = vmatpush2.msra.mxu0 0.0
        %721 = vmatprep.subr.mxu0 0.0
        %722 = vmatpush2.msra.mxu0 0.0
        %723 = vmatprep.subr.mxu0 0.0
        %724 = vmatpush2.msra.mxu0 0.0
        %725 = vmatprep.subr.mxu0 0.0
        %726 = vmatpush2.msra.mxu0 0.0
        %727 = vmatprep.subr.mxu0 0.0
        %728 = vmatpush2.msra.mxu0 0.0
        %729 = vmatprep.subr.mxu0 0.0
        %730 = vmatpush2.msra.mxu0 0.0
        %731 = vmatprep.subr.mxu0 0.0
        %732 = vmatpush2.msra.mxu0 0.0
        %733 = vmatprep.subr.mxu0 0.0
        %734 = vmatpush2.msra.mxu0 0.0
        %735 = vmatprep.subr.mxu0 0.0
        %736 = vmatpush2.msra.mxu0 0.0
        %737 = vmatprep.subr.mxu0 0.0
        %738 = vmatpush2.msra.mxu0 0.0
        %739 = vmatprep.subr.mxu0 0.0
        %740 = vmatpush2.msra.mxu0 0.0
        %741 = vmatprep.subr.mxu0 0.0
        %742 = vmatpush2.msra.mxu0 0.0
        %743 = vmatprep.subr.mxu0 0.0
        %744 = vmatpush2.msra.mxu0 0.0
        %745 = vmatprep.subr.mxu0 0.0
        %746 = vmatpush2.msra.mxu0 0.0
        %747 = vmatprep.subr.mxu0 0.0
        %748 = vmatpush2.msra.mxu0 0.0
        %749 = vmatprep.subr.mxu0 0.0
        %750 = vmatpush2.msra.mxu0 0.0
        %751 = vmatprep.mubr.f32.mxu0 0.0
        %752 = vmatmul.mubr.f32.gmra.mxu0 %v685
        %v753 = vpop.f32.mrf.mxu0
        %v754 = vadd.f32 %v681, %v753
        %v755 = vpop.f32.mrf.mxu0
        %756 = vdwg.mxu0
        %v757 = vld [vmem:[#allocation11] sm:$0x1]
        %v758 = vadd.f32 %v754, %v757
        %v759 = vmul.f32 %v758, 0.5
        %v760 = vtanh.pop %v759
        %v761 = vadd.f32 %v760, 1.0
        %v762 = vmul.f32 %v761, 0.5
        %v763 = vtanh.pop %v758
        %v765 = vlaneseq
        %v766 = vshrl.u32 %v765, 7
        %v767 = vsub.s32 0, %v766
        %v768 = vrot.slane %v599, %v767
        %769 = vrot.lane.b32.xlu0 %v768, 32
        %v770 = vpop.permute.xlu0 %769
        %v772 = vmul.f32 %v762, %v770
        %774 = vrot.lane.b32.xlu0 %v763, 64
        %v775 = vpop.permute.xlu0 %774
        %v777 = vmul.f32 %v762, %v775
        %779 = vrot.lane.b32.xlu0 %v777, 32
        %v780 = vpop.permute.xlu0 %779
        %v782 = vadd.f32 %v772, %v780
        %v783 = vtanh.pop %v782
        %785 = vrot.lane.b32.xlu0 %v783, 64
        %v786 = vpop.permute.xlu0 %785
        %v788 = vmul.f32 %v762, %v786
        %v789 = vld [vmem:[#allocation8] sm:$0xff]
        %v790 = vmul.f32 %v789, %v789
        %v791 = vsel %vm610, %v790, 0.0
        %792 = vadd.xlane.f32.xlu0 %v791
        %v793 = vpop.xlane.xlu0 %792
        %v794 = vrsqrt.pop %v793
        %v795 = vmul.f32 %v793, %v794
        %vm796 = vcmp.eq.f32.partialorder %v793, inf
        %v797 = vsel %vm796, %v793, %v795
        %vm798 = vcmp.eq.f32.partialorder %v793, 0.0
        %v799 = vand.u32 %v793, 2147483648
        %v800 = vsel %vm798, %v799, %v797
        %v801 = vadd.f32 %v800, 1e-08
        %v802 = vrcp.pop %v801
        %v803 = vmul.f32 %v789, %v802
        %v804 = vsel %vm610, %v789, 0.0
        %v805 = vrot.slane %v804, 4
        %v806 = vadd.f32 %v804, %v805
        %v807 = vrot.slane %v806, 2
        %v808 = vadd.f32 %v806, %v807
        %v809 = vrot.slane %v808, 1
        %v810 = vadd.f32 %v808, %v809
        %v811 = vmul.f32 %v810, %v810
        %v812 = vsel %vm610, %v811, 0.0
        %813 = vadd.xlane.f32.xlu0 %v812
        %v814 = vpop.xlane.xlu0 %813
        %v815 = vrsqrt.pop %v814
        %v816 = vmul.f32 %v814, %v815
        %vm817 = vcmp.eq.f32.partialorder %v814, inf
        %v818 = vsel %vm817, %v814, %v816
        %vm819 = vcmp.eq.f32.partialorder %v814, 0.0
        %v820 = vand.u32 %v814, 2147483648
        %v821 = vsel %vm819, %v820, %v818
        %v822 = vadd.f32 %v821, 1e-08
        %v823 = vrcp.pop %v822
        %v824 = vmul.f32 %v810, %v823
        %v825 = vmul.f32 %v803, %v824
        %v826 = vsel %vm610, %v825, 0.0
        %827 = vadd.xlane.f32.xlu0 %v826
        %v828 = vpop.xlane.xlu0 %827
        %v830 = vsel %vm610, %v803, 0
        %832 = vmatprep.subr.mxu0 0.0
        %833 = vmatpush1.xpose.msra.mxu0 0.0
        %834 = vmatprep.subr.mxu0 0.0
        %835 = vmatpush1.xpose.msra.mxu0 0.0
        %836 = vmatprep.subr.mxu0 0.0
        %837 = vmatpush1.xpose.msra.mxu0 0.0
        %838 = vmatprep.subr.mxu0 0.0
        %839 = vmatpush1.xpose.msra.mxu0 0.0
        %840 = vmatprep.subr.mxu0 0.0
        %841 = vmatpush1.xpose.msra.mxu0 0.0
        %842 = vmatprep.subr.mxu0 0.0
        %843 = vmatpush1.xpose.msra.mxu0 0.0
        %844 = vmatprep.subr.mxu0 0.0
        %845 = vmatpush1.xpose.msra.mxu0 0.0
        %846 = vmatprep.subr.mxu0 0.0
        %847 = vmatpush1.xpose.msra.mxu0 0.0
        %848 = vmatprep.subr.mxu0 0.0
        %849 = vmatpush1.xpose.msra.mxu0 0.0
        %850 = vmatprep.subr.mxu0 0.0
        %851 = vmatpush1.xpose.msra.mxu0 0.0
        %852 = vmatprep.subr.mxu0 0.0
        %853 = vmatpush1.xpose.msra.mxu0 0.0
        %854 = vmatprep.subr.mxu0 0.0
        %855 = vmatpush1.xpose.msra.mxu0 0.0
        %856 = vmatprep.subr.mxu0 0.0
        %857 = vmatpush1.xpose.msra.mxu0 0.0
        %858 = vmatprep.subr.mxu0 0.0
        %859 = vmatpush1.xpose.msra.mxu0 0.0
        %860 = vmatprep.subr.mxu0 0.0
        %861 = vmatpush1.xpose.msra.mxu0 0.0
        %862 = vmatprep.subr.mxu0 0.0
        %863 = vmatpush1.xpose.msra.mxu0 %v830
        %864 = vmatprep.subr.mxu0 0.0
        %865 = vmatpush2.xpose.msra.mxu0 0.0
        %866 = vmatprep.subr.mxu0 0.0
        %867 = vmatpush2.xpose.msra.mxu0 0.0
        %868 = vmatprep.subr.mxu0 0.0
        %869 = vmatpush2.xpose.msra.mxu0 0.0
        %870 = vmatprep.subr.mxu0 0.0
        %871 = vmatpush2.xpose.msra.mxu0 0.0
        %872 = vmatprep.subr.mxu0 0.0
        %873 = vmatpush2.xpose.msra.mxu0 0.0
        %874 = vmatprep.subr.mxu0 0.0
        %875 = vmatpush2.xpose.msra.mxu0 0.0
        %876 = vmatprep.subr.mxu0 0.0
        %877 = vmatpush2.xpose.msra.mxu0 0.0
        %878 = vmatprep.subr.mxu0 0.0
        %879 = vmatpush2.xpose.msra.mxu0 0.0
        %880 = vmatprep.subr.mxu0 0.0
        %881 = vmatpush2.xpose.msra.mxu0 0.0
        %882 = vmatprep.subr.mxu0 0.0
        %883 = vmatpush2.xpose.msra.mxu0 0.0
        %884 = vmatprep.subr.mxu0 0.0
        %885 = vmatpush2.xpose.msra.mxu0 0.0
        %886 = vmatprep.subr.mxu0 0.0
        %887 = vmatpush2.xpose.msra.mxu0 0.0
        %888 = vmatprep.subr.mxu0 0.0
        %889 = vmatpush2.xpose.msra.mxu0 0.0
        %890 = vmatprep.subr.mxu0 0.0
        %891 = vmatpush2.xpose.msra.mxu0 0.0
        %892 = vmatprep.subr.mxu0 0.0
        %893 = vmatpush2.xpose.msra.mxu0 0.0
        %894 = vmatprep.subr.mxu0 0.0
        %895 = vmatpush2.xpose.msra.mxu0 0.0
        %896 = vmatprep.mubr.f32.mxu0 0.0
        %897 = vmatmul.mubr.f32.gmra.mxu0 %v830
        %v898 = vpop.f32.mrf.mxu0
        %v899 = vadd.f32 0.0, %v898
        %v900 = vpop.f32.mrf.mxu0
        %901 = vdwg.mxu0
        %vm902 = vcmp.gt.f32.partialorder %v600, 0.5
        %v903 = vsel %vm902, 1, 0
        %v904 = vlaneseq
        %v905 = vshrl.u32 %v904, 7
        %v906 = vsub.s32 0, %v905
        %v907 = vrot.slane %v903, %v906
        %vm908 = vcmp.eq.s32.totalorder %v907, 1
        %v909 = vsel %vm908, %v899, -1e+30
        %vm910 = vcmask 57344
        %v911 = vsel %vm910, %v600, -inf
        %912 = vmax.xlane.f32.xlu0 %v911
        %v913 = vpop.xlane.xlu0 %912
        %vm914 = vcmp.gt.f32.partialorder %v913, 0.5
        %vm915 = vcmask 64512
        %v916 = vsel %vm915, %v909, -inf
        %917 = vmax.xlane.f32.xlu0 %v916
        %v918 = vpop.xlane.xlu0 %917
        %v919 = vsub.f32 0.0, %v918
        %v920 = vsel %vm914, 1, 0
        %v921 = vlaneseq
        %v922 = vshrl.u32 %v921, 7
        %v923 = vsub.s32 0, %v922
        %v924 = vrot.slane %v920, %v923
        %vm925 = vcmp.eq.s32.totalorder %v924, 1
        %v926 = vsel %vm925, %v919, 0.0
        %v927 = vmul.f32 %v828, 0.5
        %v928 = vmul.f32 %v926, 0.5
        %v929 = vadd.f32 %v927, %v928
        %vm930 = vcmp.gt.f32.partialorder %v601, 0.5
        %v931 = vsel %vm930, -1.0, %v929
        %v932 = vld [vmem:[#allocation16] sm:$0x1]
        %934 = vset.pattern.permute.xlu0 0
        %935 = vperm.xlu0 %934, %v931
        %v936 = vpop.permute.xlu0 %935
        %v939 = vlaneseq
        %v940 = vshrl.u32 %v939, 7
        %v941 = vsub.s32 0, %v940
        %v942 = vrot.slane %v932, %v941
        %v944 = vmul.f32 %v936, %v942
        %v945 = vld [vmem:[#allocation17] sm:$0x1]
        %v947 = vlaneseq
        %v948 = vshrl.u32 %v947, 7
        %v949 = vsub.s32 0, %v948
        %v950 = vrot.slane %v945, %v949
        %v952 = vadd.f32 %v944, %v950
        %v953 = vmax.f32 %v952, 0.0
        %v954 = vld [vmem:[#allocation19] sm:$0x1]
        %v956 = vlaneseq
        %v957 = vshrl.u32 %v956, 7
        %v958 = vsub.s32 0, %v957
        %v959 = vrot.slane %v954, %v958
        %v961 = vmul.f32 %v953, %v959
        %962 = vadd.xlane.f32.xlu0 %v961
        %v963 = vpop.xlane.xlu0 %962
        %v964 = vld [vmem:[#allocation7] sm:$0x1]
        %v966 = vlaneseq
        %v967 = vshrl.u32 %v966, 7
        %v968 = vsub.s32 0, %v967
        %v969 = vrot.slane %v964, %v968
        %v971 = vadd.f32 %v963, %v969
        %v972 = vmul.f32 %v971, 2.0
        %vm973 = vcmask 7168
        %v974 = vsel %vm973, %v972, -inf
        %v975 = vrot.slane %v974, 4
        %v976 = vmax.f32 %v974, %v975
        %v977 = vrot.slane %v976, 2
        %v978 = vmax.f32 %v976, %v977
        %v979 = vrot.slane %v978, 1
        %v980 = vmax.f32 %v978, %v979
        %v981 = vsub.f32 %v972, %v980
        %v982 = vmul.f32 %v981, 1.442695
        %v983 = vpow.pop %v982
        %v984 = vsel %vm973, %v983, 0.0
        %v985 = vrot.slane %v984, 4
        %v986 = vadd.f32 %v984, %v985
        %v987 = vrot.slane %v986, 2
        %v988 = vadd.f32 %v986, %v987
        %v989 = vrot.slane %v988, 1
        %v990 = vadd.f32 %v988, %v989
        %v991 = vrcp.pop %v990
        %v992 = vmul.f32 %v983, %v991
        %994 = vset.pattern.permute.xlu0 0
        %995 = vperm.xlu0 %994, %v992
        %v996 = vpop.permute.xlu0 %995
        %v998 = vmul.f32 %v789, %v996
        %v999 = vld [vmem:[%s8] sm:$0xff]
        %v1000 = vld [vmem:[%s8 + $0x8] sm:$0xff]
        %v1001 = vld [vmem:[%s8 + $0x10] sm:$0xff]
        %v1002 = vld [vmem:[%s8 + $0x18] sm:$0xff]
        %v1004 = vsel %vm610, %v998, 0
        %1006 = vmatprep.subr.mxu0 0.0
        %1007 = vmatpush1.msra.mxu0 0.0
        %1008 = vmatprep.subr.mxu0 0.0
        %1009 = vmatpush1.msra.mxu0 0.0
        %1010 = vmatprep.subr.mxu0 0.0
        %1011 = vmatpush1.msra.mxu0 0.0
        %1012 = vmatprep.subr.mxu0 0.0
        %1013 = vmatpush1.msra.mxu0 0.0
        %1014 = vmatprep.subr.mxu0 0.0
        %1015 = vmatpush1.msra.mxu0 0.0
        %1016 = vmatprep.subr.mxu0 0.0
        %1017 = vmatpush1.msra.mxu0 0.0
        %1018 = vmatprep.subr.mxu0 0.0
        %1019 = vmatpush1.msra.mxu0 0.0
        %1020 = vmatprep.subr.mxu0 0.0
        %1021 = vmatpush1.msra.mxu0 0.0
        %1022 = vmatprep.subr.mxu0 0.0
        %1023 = vmatpush1.msra.mxu0 0.0
        %1024 = vmatprep.subr.mxu0 0.0
        %1025 = vmatpush1.msra.mxu0 0.0
        %1026 = vmatprep.subr.mxu0 0.0
        %1027 = vmatpush1.msra.mxu0 0.0
        %1028 = vmatprep.subr.mxu0 0.0
        %1029 = vmatpush1.msra.mxu0 0.0
        %1030 = vmatprep.subr.mxu0 0.0
        %1031 = vmatpush1.msra.mxu0 %v1002
        %1032 = vmatprep.subr.mxu0 0.0
        %1033 = vmatpush1.msra.mxu0 %v1001
        %1034 = vmatprep.subr.mxu0 0.0
        %1035 = vmatpush1.msra.mxu0 %v1000
        %1036 = vmatprep.subr.mxu0 0.0
        %1037 = vmatpush1.msra.mxu0 %v999
        %1038 = vmatprep.subr.mxu0 0.0
        %1039 = vmatpush2.msra.mxu0 0.0
        %1040 = vmatprep.subr.mxu0 0.0
        %1041 = vmatpush2.msra.mxu0 0.0
        %1042 = vmatprep.subr.mxu0 0.0
        %1043 = vmatpush2.msra.mxu0 0.0
        %1044 = vmatprep.subr.mxu0 0.0
        %1045 = vmatpush2.msra.mxu0 0.0
        %1046 = vmatprep.subr.mxu0 0.0
        %1047 = vmatpush2.msra.mxu0 0.0
        %1048 = vmatprep.subr.mxu0 0.0
        %1049 = vmatpush2.msra.mxu0 0.0
        %1050 = vmatprep.subr.mxu0 0.0
        %1051 = vmatpush2.msra.mxu0 0.0
        %1052 = vmatprep.subr.mxu0 0.0
        %1053 = vmatpush2.msra.mxu0 0.0
        %1054 = vmatprep.subr.mxu0 0.0
        %1055 = vmatpush2.msra.mxu0 0.0
        %1056 = vmatprep.subr.mxu0 0.0
        %1057 = vmatpush2.msra.mxu0 0.0
        %1058 = vmatprep.subr.mxu0 0.0
        %1059 = vmatpush2.msra.mxu0 0.0
        %1060 = vmatprep.subr.mxu0 0.0
        %1061 = vmatpush2.msra.mxu0 0.0
        %1062 = vmatprep.subr.mxu0 0.0
        %1063 = vmatpush2.msra.mxu0 0.0
        %1064 = vmatprep.subr.mxu0 0.0
        %1065 = vmatpush2.msra.mxu0 0.0
        %1066 = vmatprep.subr.mxu0 0.0
        %1067 = vmatpush2.msra.mxu0 0.0
        %1068 = vmatprep.subr.mxu0 0.0
        %1069 = vmatpush2.msra.mxu0 0.0
        %1070 = vmatprep.mubr.f32.mxu0 0.0
        %1071 = vmatmul.mubr.f32.gmra.mxu0 %v1004
        %v1072 = vpop.f32.mrf.mxu0
        %v1073 = vadd.f32 0.0, %v1072
        %v1074 = vpop.f32.mrf.mxu0
        %1075 = vdwg.mxu0
        %v1076 = vld [vmem:[%s9] sm:$0xff]
        %v1077 = vld [vmem:[%s9 + $0x8] sm:$0xff]
        %v1078 = vld [vmem:[%s9 + $0x10] sm:$0xff]
        %v1079 = vld [vmem:[%s9 + $0x18] sm:$0xff]
        %1081 = vrot.lane.b32.xlu0 %v788, 32
        %v1082 = vpop.permute.xlu0 %1081
        %v1083 = vsel %vm610, %v1082, 0
        %1085 = vmatprep.subr.mxu0 0.0
        %1086 = vmatpush1.msra.mxu0 0.0
        %1087 = vmatprep.subr.mxu0 0.0
        %1088 = vmatpush1.msra.mxu0 0.0
        %1089 = vmatprep.subr.mxu0 0.0
        %1090 = vmatpush1.msra.mxu0 0.0
        %1091 = vmatprep.subr.mxu0 0.0
        %1092 = vmatpush1.msra.mxu0 0.0
        %1093 = vmatprep.subr.mxu0 0.0
        %1094 = vmatpush1.msra.mxu0 0.0
        %1095 = vmatprep.subr.mxu0 0.0
        %1096 = vmatpush1.msra.mxu0 0.0
        %1097 = vmatprep.subr.mxu0 0.0
        %1098 = vmatpush1.msra.mxu0 0.0
        %1099 = vmatprep.subr.mxu0 0.0
        %1100 = vmatpush1.msra.mxu0 0.0
        %1101 = vmatprep.subr.mxu0 0.0
        %1102 = vmatpush1.msra.mxu0 0.0
        %1103 = vmatprep.subr.mxu0 0.0
        %1104 = vmatpush1.msra.mxu0 0.0
        %1105 = vmatprep.subr.mxu0 0.0
        %1106 = vmatpush1.msra.mxu0 0.0
        %1107 = vmatprep.subr.mxu0 0.0
        %1108 = vmatpush1.msra.mxu0 0.0
        %1109 = vmatprep.subr.mxu0 0.0
        %1110 = vmatpush1.msra.mxu0 %v1079
        %1111 = vmatprep.subr.mxu0 0.0
        %1112 = vmatpush1.msra.mxu0 %v1078
        %1113 = vmatprep.subr.mxu0 0.0
        %1114 = vmatpush1.msra.mxu0 %v1077
        %1115 = vmatprep.subr.mxu0 0.0
        %1116 = vmatpush1.msra.mxu0 %v1076
        %1117 = vmatprep.subr.mxu0 0.0
        %1118 = vmatpush2.msra.mxu0 0.0
        %1119 = vmatprep.subr.mxu0 0.0
        %1120 = vmatpush2.msra.mxu0 0.0
        %1121 = vmatprep.subr.mxu0 0.0
        %1122 = vmatpush2.msra.mxu0 0.0
        %1123 = vmatprep.subr.mxu0 0.0
        %1124 = vmatpush2.msra.mxu0 0.0
        %1125 = vmatprep.subr.mxu0 0.0
        %1126 = vmatpush2.msra.mxu0 0.0
        %1127 = vmatprep.subr.mxu0 0.0
        %1128 = vmatpush2.msra.mxu0 0.0
        %1129 = vmatprep.subr.mxu0 0.0
        %1130 = vmatpush2.msra.mxu0 0.0
        %1131 = vmatprep.subr.mxu0 0.0
        %1132 = vmatpush2.msra.mxu0 0.0
        %1133 = vmatprep.subr.mxu0 0.0
        %1134 = vmatpush2.msra.mxu0 0.0
        %1135 = vmatprep.subr.mxu0 0.0
        %1136 = vmatpush2.msra.mxu0 0.0
        %1137 = vmatprep.subr.mxu0 0.0
        %1138 = vmatpush2.msra.mxu0 0.0
        %1139 = vmatprep.subr.mxu0 0.0
        %1140 = vmatpush2.msra.mxu0 0.0
        %1141 = vmatprep.subr.mxu0 0.0
        %1142 = vmatpush2.msra.mxu0 0.0
        %1143 = vmatprep.subr.mxu0 0.0
        %1144 = vmatpush2.msra.mxu0 0.0
        %1145 = vmatprep.subr.mxu0 0.0
        %1146 = vmatpush2.msra.mxu0 0.0
        %1147 = vmatprep.subr.mxu0 0.0
        %1148 = vmatpush2.msra.mxu0 0.0
        %1149 = vmatprep.mubr.f32.mxu0 0.0
        %1150 = vmatmul.mubr.f32.gmra.mxu0 %v1083
        %v1151 = vpop.f32.mrf.mxu0
        %v1152 = vadd.f32 0.0, %v1151
        %v1153 = vpop.f32.mrf.mxu0
        %1154 = vdwg.mxu0
        %v1155 = vlaneseq
        %v1156 = vshrl.u32 %v1155, 7
        %v1157 = vsub.s32 0, %v1156
        %v1158 = vrot.slane %v1152, %v1157
        %1160 = vrot.lane.b32.xlu0 %v1158, 32
        %v1161 = vpop.permute.xlu0 %1160
        %v1163 = vadd.f32 %v1073, %v1161
        %v1164 = vtanh.pop %v1163
        %v1165 = vld [vmem:[#allocation13] sm:$0x1]
        %1167 = vrot.lane.b32.xlu0 %v1164, 96
        %v1168 = vpop.permute.xlu0 %1167
        %v1170 = vsel %vm610, %v1165, 0
        %v1172 = vsel %vm610, %v1168, 0
        %1174 = vmatprep.subr.mxu0 0.0
        %1175 = vmatpush1.xpose.msra.mxu0 0.0
        %1176 = vmatprep.subr.mxu0 0.0
        %1177 = vmatpush1.xpose.msra.mxu0 0.0
        %1178 = vmatprep.subr.mxu0 0.0
        %1179 = vmatpush1.xpose.msra.mxu0 0.0
        %1180 = vmatprep.subr.mxu0 0.0
        %1181 = vmatpush1.xpose.msra.mxu0 0.0
        %1182 = vmatprep.subr.mxu0 0.0
        %1183 = vmatpush1.xpose.msra.mxu0 0.0
        %1184 = vmatprep.subr.mxu0 0.0
        %1185 = vmatpush1.xpose.msra.mxu0 0.0
        %1186 = vmatprep.subr.mxu0 0.0
        %1187 = vmatpush1.xpose.msra.mxu0 0.0
        %1188 = vmatprep.subr.mxu0 0.0
        %1189 = vmatpush1.xpose.msra.mxu0 0.0
        %1190 = vmatprep.subr.mxu0 0.0
        %1191 = vmatpush1.xpose.msra.mxu0 0.0
        %1192 = vmatprep.subr.mxu0 0.0
        %1193 = vmatpush1.xpose.msra.mxu0 0.0
        %1194 = vmatprep.subr.mxu0 0.0
        %1195 = vmatpush1.xpose.msra.mxu0 0.0
        %1196 = vmatprep.subr.mxu0 0.0
        %1197 = vmatpush1.xpose.msra.mxu0 0.0
        %1198 = vmatprep.subr.mxu0 0.0
        %1199 = vmatpush1.xpose.msra.mxu0 0.0
        %1200 = vmatprep.subr.mxu0 0.0
        %1201 = vmatpush1.xpose.msra.mxu0 0.0
        %1202 = vmatprep.subr.mxu0 0.0
        %1203 = vmatpush1.xpose.msra.mxu0 0.0
        %1204 = vmatprep.subr.mxu0 0.0
        %1205 = vmatpush1.xpose.msra.mxu0 %v1172
        %1206 = vmatprep.subr.mxu0 0.0
        %1207 = vmatpush2.xpose.msra.mxu0 0.0
        %1208 = vmatprep.subr.mxu0 0.0
        %1209 = vmatpush2.xpose.msra.mxu0 0.0
        %1210 = vmatprep.subr.mxu0 0.0
        %1211 = vmatpush2.xpose.msra.mxu0 0.0
        %1212 = vmatprep.subr.mxu0 0.0
        %1213 = vmatpush2.xpose.msra.mxu0 0.0
        %1214 = vmatprep.subr.mxu0 0.0
        %1215 = vmatpush2.xpose.msra.mxu0 0.0
        %1216 = vmatprep.subr.mxu0 0.0
        %1217 = vmatpush2.xpose.msra.mxu0 0.0
        %1218 = vmatprep.subr.mxu0 0.0
        %1219 = vmatpush2.xpose.msra.mxu0 0.0
        %1220 = vmatprep.subr.mxu0 0.0
        %1221 = vmatpush2.xpose.msra.mxu0 0.0
        %1222 = vmatprep.subr.mxu0 0.0
        %1223 = vmatpush2.xpose.msra.mxu0 0.0
        %1224 = vmatprep.subr.mxu0 0.0
        %1225 = vmatpush2.xpose.msra.mxu0 0.0
        %1226 = vmatprep.subr.mxu0 0.0
        %1227 = vmatpush2.xpose.msra.mxu0 0.0
        %1228 = vmatprep.subr.mxu0 0.0
        %1229 = vmatpush2.xpose.msra.mxu0 0.0
        %1230 = vmatprep.subr.mxu0 0.0
        %1231 = vmatpush2.xpose.msra.mxu0 0.0
        %1232 = vmatprep.subr.mxu0 0.0
        %1233 = vmatpush2.xpose.msra.mxu0 0.0
        %1234 = vmatprep.subr.mxu0 0.0
        %1235 = vmatpush2.xpose.msra.mxu0 0.0
        %1236 = vmatprep.subr.mxu0 0.0
        %1237 = vmatpush2.xpose.msra.mxu0 0.0
        %1238 = vmatprep.mubr.f32.mxu0 0.0
        %1239 = vmatmul.mubr.f32.gmra.mxu0 %v1170
        %v1240 = vpop.f32.mrf.mxu0
        %v1241 = vadd.f32 0.0, %v1240
        %v1242 = vpop.f32.mrf.mxu0
        %1243 = vdwg.mxu0
        %v1244 = vsel %vm910, %v1241, -inf
        %1245 = vmax.xlane.f32.xlu0 %v1244
        %v1246 = vpop.xlane.xlu0 %1245
        %v1247 = vsub.f32 %v1241, %v1246
        %v1248 = vmul.f32 %v1247, 1.442695
        %v1249 = vpow.pop %v1248
        %v1250 = vsel %vm910, %v1249, 0.0
        %1251 = vadd.xlane.f32.xlu0 %v1250
        %v1252 = vpop.xlane.xlu0 %1251
        %v1253 = vrcp.pop %v1252
        %v1254 = vmul.f32 %v1249, %v1253
        %1256 = vrot.lane.b32.xlu0 %v1073, 96
        %v1257 = vpop.permute.xlu0 %1256
        %v1260 = vsel %vm915, %v1254, 0
        %1262 = vmatprep.subr.mxu0 0.0
        %1263 = vmatpush1.msra.mxu0 0.0
        %1264 = vmatprep.subr.mxu0 0.0
        %1265 = vmatpush1.msra.mxu0 0.0
        %1266 = vmatprep.subr.mxu0 0.0
        %1267 = vmatpush1.msra.mxu0 0.0
        %1268 = vmatprep.subr.mxu0 0.0
        %1269 = vmatpush1.msra.mxu0 0.0
        %1270 = vmatprep.subr.mxu0 0.0
        %1271 = vmatpush1.msra.mxu0 0.0
        %1272 = vmatprep.subr.mxu0 0.0
        %1273 = vmatpush1.msra.mxu0 0.0
        %1274 = vmatprep.subr.mxu0 0.0
        %1275 = vmatpush1.msra.mxu0 0.0
        %1276 = vmatprep.subr.mxu0 0.0
        %1277 = vmatpush1.msra.mxu0 0.0
        %1278 = vmatprep.subr.mxu0 0.0
        %1279 = vmatpush1.msra.mxu0 0.0
        %1280 = vmatprep.subr.mxu0 0.0
        %1281 = vmatpush1.msra.mxu0 0.0
        %1282 = vmatprep.subr.mxu0 0.0
        %1283 = vmatpush1.msra.mxu0 0.0
        %1284 = vmatprep.subr.mxu0 0.0
        %1285 = vmatpush1.msra.mxu0 0.0
        %1286 = vmatprep.subr.mxu0 0.0
        %1287 = vmatpush1.msra.mxu0 0.0
        %1288 = vmatprep.subr.mxu0 0.0
        %1289 = vmatpush1.msra.mxu0 0.0
        %1290 = vmatprep.subr.mxu0 0.0
        %1291 = vmatpush1.msra.mxu0 0.0
        %1292 = vmatprep.subr.mxu0 0.0
        %1293 = vmatpush1.msra.mxu0 %v1257
        %1294 = vmatprep.subr.mxu0 0.0
        %1295 = vmatpush2.msra.mxu0 0.0
        %1296 = vmatprep.subr.mxu0 0.0
        %1297 = vmatpush2.msra.mxu0 0.0
        %1298 = vmatprep.subr.mxu0 0.0
        %1299 = vmatpush2.msra.mxu0 0.0
        %1300 = vmatprep.subr.mxu0 0.0
        %1301 = vmatpush2.msra.mxu0 0.0
        %1302 = vmatprep.subr.mxu0 0.0
        %1303 = vmatpush2.msra.mxu0 0.0
        %1304 = vmatprep.subr.mxu0 0.0
        %1305 = vmatpush2.msra.mxu0 0.0
        %1306 = vmatprep.subr.mxu0 0.0
        %1307 = vmatpush2.msra.mxu0 0.0
        %1308 = vmatprep.subr.mxu0 0.0
        %1309 = vmatpush2.msra.mxu0 0.0
        %1310 = vmatprep.subr.mxu0 0.0
        %1311 = vmatpush2.msra.mxu0 0.0
        %1312 = vmatprep.subr.mxu0 0.0
        %1313 = vmatpush2.msra.mxu0 0.0
        %1314 = vmatprep.subr.mxu0 0.0
        %1315 = vmatpush2.msra.mxu0 0.0
        %1316 = vmatprep.subr.mxu0 0.0
        %1317 = vmatpush2.msra.mxu0 0.0
        %1318 = vmatprep.subr.mxu0 0.0
        %1319 = vmatpush2.msra.mxu0 0.0
        %1320 = vmatprep.subr.mxu0 0.0
        %1321 = vmatpush2.msra.mxu0 0.0
        %1322 = vmatprep.subr.mxu0 0.0
        %1323 = vmatpush2.msra.mxu0 0.0
        %1324 = vmatprep.subr.mxu0 0.0
        %1325 = vmatpush2.msra.mxu0 0.0
        %1326 = vmatprep.mubr.f32.mxu0 0.0
        %1327 = vmatmul.mubr.f32.gmra.mxu0 %v1260
        %v1328 = vpop.f32.mrf.mxu0
        %v1329 = vadd.f32 0.0, %v1328
        %v1330 = vpop.f32.mrf.mxu0
        %1331 = vdwg.mxu0
        %v1332 = vld [vmem:[%s9 + $0x20] sm:$0xff]
        %v1333 = vld [vmem:[%s9 + $0x28] sm:$0xff]
        %v1334 = vld [vmem:[%s9 + $0x30] sm:$0xff]
        %v1335 = vld [vmem:[%s9 + $0x38] sm:$0xff]
        %v1337 = vsel %vm610, %v1329, 0
        %1339 = vmatprep.subr.mxu0 0.0
        %1340 = vmatpush1.msra.mxu0 0.0
        %1341 = vmatprep.subr.mxu0 0.0
        %1342 = vmatpush1.msra.mxu0 0.0
        %1343 = vmatprep.subr.mxu0 0.0
        %1344 = vmatpush1.msra.mxu0 0.0
        %1345 = vmatprep.subr.mxu0 0.0
        %1346 = vmatpush1.msra.mxu0 0.0
        %1347 = vmatprep.subr.mxu0 0.0
        %1348 = vmatpush1.msra.mxu0 0.0
        %1349 = vmatprep.subr.mxu0 0.0
        %1350 = vmatpush1.msra.mxu0 0.0
        %1351 = vmatprep.subr.mxu0 0.0
        %1352 = vmatpush1.msra.mxu0 0.0
        %1353 = vmatprep.subr.mxu0 0.0
        %1354 = vmatpush1.msra.mxu0 0.0
        %1355 = vmatprep.subr.mxu0 0.0
        %1356 = vmatpush1.msra.mxu0 0.0
        %1357 = vmatprep.subr.mxu0 0.0
        %1358 = vmatpush1.msra.mxu0 0.0
        %1359 = vmatprep.subr.mxu0 0.0
        %1360 = vmatpush1.msra.mxu0 0.0
        %1361 = vmatprep.subr.mxu0 0.0
        %1362 = vmatpush1.msra.mxu0 0.0
        %1363 = vmatprep.subr.mxu0 0.0
        %1364 = vmatpush1.msra.mxu0 %v1335
        %1365 = vmatprep.subr.mxu0 0.0
        %1366 = vmatpush1.msra.mxu0 %v1334
        %1367 = vmatprep.subr.mxu0 0.0
        %1368 = vmatpush1.msra.mxu0 %v1333
        %1369 = vmatprep.subr.mxu0 0.0
        %1370 = vmatpush1.msra.mxu0 %v1332
        %1371 = vmatprep.subr.mxu0 0.0
        %1372 = vmatpush2.msra.mxu0 0.0
        %1373 = vmatprep.subr.mxu0 0.0
        %1374 = vmatpush2.msra.mxu0 0.0
        %1375 = vmatprep.subr.mxu0 0.0
        %1376 = vmatpush2.msra.mxu0 0.0
        %1377 = vmatprep.subr.mxu0 0.0
        %1378 = vmatpush2.msra.mxu0 0.0
        %1379 = vmatprep.subr.mxu0 0.0
        %1380 = vmatpush2.msra.mxu0 0.0
        %1381 = vmatprep.subr.mxu0 0.0
        %1382 = vmatpush2.msra.mxu0 0.0
        %1383 = vmatprep.subr.mxu0 0.0
        %1384 = vmatpush2.msra.mxu0 0.0
        %1385 = vmatprep.subr.mxu0 0.0
        %1386 = vmatpush2.msra.mxu0 0.0
        %1387 = vmatprep.subr.mxu0 0.0
        %1388 = vmatpush2.msra.mxu0 0.0
        %1389 = vmatprep.subr.mxu0 0.0
        %1390 = vmatpush2.msra.mxu0 0.0
        %1391 = vmatprep.subr.mxu0 0.0
        %1392 = vmatpush2.msra.mxu0 0.0
        %1393 = vmatprep.subr.mxu0 0.0
        %1394 = vmatpush2.msra.mxu0 0.0
        %1395 = vmatprep.subr.mxu0 0.0
        %1396 = vmatpush2.msra.mxu0 0.0
        %1397 = vmatprep.subr.mxu0 0.0
        %1398 = vmatpush2.msra.mxu0 0.0
        %1399 = vmatprep.subr.mxu0 0.0
        %1400 = vmatpush2.msra.mxu0 0.0
        %1401 = vmatprep.subr.mxu0 0.0
        %1402 = vmatpush2.msra.mxu0 0.0
        %1403 = vmatprep.mubr.f32.mxu0 0.0
        %1404 = vmatmul.mubr.f32.gmra.mxu0 %v1337
        %v1405 = vpop.f32.mrf.mxu0
        %v1406 = vadd.f32 0.0, %v1405
        %v1407 = vpop.f32.mrf.mxu0
        %1408 = vdwg.mxu0
        %v1409 = vlaneseq
        %v1410 = vshrl.u32 %v1409, 7
        %v1411 = vsub.s32 0, %v1410
        %v1412 = vrot.slane %v1406, %v1411
        %v1413 = vadd.f32 %v1073, %v1412
        %v1414 = vtanh.pop %v1413
        %v1415 = vld [vmem:[#allocation14] sm:$0x1]
        %v1417 = vsel %vm610, %v1415, 0
        %v1420 = vsel %vm610, %v1414, 0
        %1422 = vmatprep.subr.mxu0 0.0
        %1423 = vmatpush1.xpose.msra.mxu0 0.0
        %1424 = vmatprep.subr.mxu0 0.0
        %1425 = vmatpush1.xpose.msra.mxu0 0.0
        %1426 = vmatprep.subr.mxu0 0.0
        %1427 = vmatpush1.xpose.msra.mxu0 0.0
        %1428 = vmatprep.subr.mxu0 0.0
        %1429 = vmatpush1.xpose.msra.mxu0 0.0
        %1430 = vmatprep.subr.mxu0 0.0
        %1431 = vmatpush1.xpose.msra.mxu0 0.0
        %1432 = vmatprep.subr.mxu0 0.0
        %1433 = vmatpush1.xpose.msra.mxu0 0.0
        %1434 = vmatprep.subr.mxu0 0.0
        %1435 = vmatpush1.xpose.msra.mxu0 0.0
        %1436 = vmatprep.subr.mxu0 0.0
        %1437 = vmatpush1.xpose.msra.mxu0 0.0
        %1438 = vmatprep.subr.mxu0 0.0
        %1439 = vmatpush1.xpose.msra.mxu0 0.0
        %1440 = vmatprep.subr.mxu0 0.0
        %1441 = vmatpush1.xpose.msra.mxu0 0.0
        %1442 = vmatprep.subr.mxu0 0.0
        %1443 = vmatpush1.xpose.msra.mxu0 0.0
        %1444 = vmatprep.subr.mxu0 0.0
        %1445 = vmatpush1.xpose.msra.mxu0 0.0
        %1446 = vmatprep.subr.mxu0 0.0
        %1447 = vmatpush1.xpose.msra.mxu0 0.0
        %1448 = vmatprep.subr.mxu0 0.0
        %1449 = vmatpush1.xpose.msra.mxu0 0.0
        %1450 = vmatprep.subr.mxu0 0.0
        %1451 = vmatpush1.xpose.msra.mxu0 0.0
        %1452 = vmatprep.subr.mxu0 0.0
        %1453 = vmatpush1.xpose.msra.mxu0 %v1420
        %1454 = vmatprep.subr.mxu0 0.0
        %1455 = vmatpush2.xpose.msra.mxu0 0.0
        %1456 = vmatprep.subr.mxu0 0.0
        %1457 = vmatpush2.xpose.msra.mxu0 0.0
        %1458 = vmatprep.subr.mxu0 0.0
        %1459 = vmatpush2.xpose.msra.mxu0 0.0
        %1460 = vmatprep.subr.mxu0 0.0
        %1461 = vmatpush2.xpose.msra.mxu0 0.0
        %1462 = vmatprep.subr.mxu0 0.0
        %1463 = vmatpush2.xpose.msra.mxu0 0.0
        %1464 = vmatprep.subr.mxu0 0.0
        %1465 = vmatpush2.xpose.msra.mxu0 0.0
        %1466 = vmatprep.subr.mxu0 0.0
        %1467 = vmatpush2.xpose.msra.mxu0 0.0
        %1468 = vmatprep.subr.mxu0 0.0
        %1469 = vmatpush2.xpose.msra.mxu0 0.0
        %1470 = vmatprep.subr.mxu0 0.0
        %1471 = vmatpush2.xpose.msra.mxu0 0.0
        %1472 = vmatprep.subr.mxu0 0.0
        %1473 = vmatpush2.xpose.msra.mxu0 0.0
        %1474 = vmatprep.subr.mxu0 0.0
        %1475 = vmatpush2.xpose.msra.mxu0 0.0
        %1476 = vmatprep.subr.mxu0 0.0
        %1477 = vmatpush2.xpose.msra.mxu0 0.0
        %1478 = vmatprep.subr.mxu0 0.0
        %1479 = vmatpush2.xpose.msra.mxu0 0.0
        %1480 = vmatprep.subr.mxu0 0.0
        %1481 = vmatpush2.xpose.msra.mxu0 0.0
        %1482 = vmatprep.subr.mxu0 0.0
        %1483 = vmatpush2.xpose.msra.mxu0 0.0
        %1484 = vmatprep.subr.mxu0 0.0
        %1485 = vmatpush2.xpose.msra.mxu0 0.0
        %1486 = vmatprep.mubr.f32.mxu0 0.0
        %1487 = vmatmul.mubr.f32.gmra.mxu0 %v1417
        %v1488 = vpop.f32.mrf.mxu0
        %v1489 = vadd.f32 0.0, %v1488
        %v1490 = vpop.f32.mrf.mxu0
        %1491 = vdwg.mxu0
        %v1492 = vsel %vm902, -1e+18, %v1489
        %v1493 = vlaneseq
        %v1494 = vshrl.u32 %v1493, 7
        %v1495 = vstv %s34
        %vm1496 = vcmp.eq.s32.totalorder %v1494, %v1495
        %v1497 = vld [vmem:[#allocation20] sm:$0x7]
        %v1499 = vlaneseq
        %v1500 = vshrl.u32 %v1499, 7
        %v1501 = vsub.s32 0, %v1500
        %v1502 = vrot.slane %v1492, %v1501
        %v1504 = vsel %vm1496, %v1502, %v1497
        %vm1505 = vcmask 59392
        %1506 = vst.msk [vmem:[#allocation20] sm:$0x7] %vm1505, %v1504
        %v1507 = vlaneseq
        %v1508 = vand.u32 %v1507, 127
        %v1509 = vsel %vm910, %v1492, -inf
        %1510 = vmax.xlane.f32.xlu0 %v1509
        %v1511 = vpop.xlane.xlu0 %1510
        %vm1512 = vcmp.ge.f32.partialorder %v1492, %v1511
        %v1513 = vsel %vm1512, %v1508, 8
        %v1514 = vsel %vm910, %v1513, 2147483647
        %v1515 = vand.u32 %v1514, 65535
        %v1516 = vshra.s32 %v1514, 16
        %v1517 = vcvt.s32.f32 %v1515
        %v1518 = vcvt.s32.f32 %v1516
        %1519 = vmin.xlane.f32.xlu0 %v1518
        %v1520 = vpop.xlane.xlu0 %1519
        %vm1521 = vcmp.eq.f32.partialorder %v1518, %v1520
        %v1522 = vsel %vm1521, %v1517, inf
        %1523 = vmin.xlane.f32.xlu0 %v1522
        %v1524 = vpop.xlane.xlu0 %1523
        %v1525 = vcvt.f32.s32 %v1524
        %v1526 = vcvt.f32.s32 %v1520
        %v1527 = vshll.u32 %v1526, 16
        %v1528 = vadd.s32 %v1527, %v1525
        %vm1529 = vcmp.eq.s32.totalorder %v1508, %v1528
        %v1530 = vlaneseq
        %v1531 = vshrl.u32 %v1530, 7
        %v1532 = vsub.s32 0, %v1531
        %v1533 = vrot.slane %v1528, %v1532
        %vm1534 = vcmp.eq.s32.totalorder %v1494, %v1533
        %vm1536 = vcmask 253952
        %1537 = vst.msk [vmem:[#allocation2] sm:$0x1] %vm1536, %v1082
        %1539 = vrot.lane.b32.xlu0 %v782, 96
        %v1540 = vpop.permute.xlu0 %1539
        %1542 = vst.msk [vmem:[#allocation3] sm:$0x1] %vm1536, %v1540
        %v1543 = vsel %vm1534, 1, 0
        %vm1544 = vcmp.eq.s32.totalorder %v1543, 1
        %v1545 = vsel %vm1544, %v789, 0.0
        %v1546 = vsel %vm610, %v1545, 0.0
        %v1547 = vrot.slane %v1546, 4
        %v1548 = vadd.f32 %v1546, %v1547
        %v1549 = vrot.slane %v1548, 2
        %v1550 = vadd.f32 %v1548, %v1549
        %v1551 = vrot.slane %v1550, 1
        %v1552 = vadd.f32 %v1550, %v1551
        %1553 = vst.msk [vmem:[#allocation4] sm:$0x1] %vm1536, %v1552
        %v1554 = vsel %vm1529, 1.0, %v600
        %1555 = vst.msk [vmem:[#allocation5] sm:$0x1] %vm910, %v1554
        %v1556 = vsel %vm1534, 1.0, %v601
        %1557 = vst.msk [vmem:[#allocation6] sm:$0xff] %vm973, %v1556
        // Predicated region
        $region117: #{fused_extract.1} parent=83 // pred_check
          %p1558 = pneg %p383
        $region118: #{fused_extract.1} parent=83 // pred_check_branch
          %1560 = sbr.rel (%p1558) target = $region120
        $region119: #{fused_extract.1} parent=83 // pred_region
          %s1562 = ssub.s32 64, 64
          %1563 = vsyncadd [#allocation10], %s1562
          %s1565 = sshll.u32 [#allocation20], 4
          %s1566 = int_to_ptr.vmem [resolvable:$true] %s1565
          %1568 = dma.vmem_to_hbm [thread:$0]  %s1566, 64, %s16, [#allocation10]
        $region120: #{fused_extract.1} parent=83 // pred_fallthru
          _
        // Predicated region
        $region121: #{fused_extract.1} parent=83 // pred_check
          %p1569 = pneg %p383
        $region122: #{fused_extract.1} parent=83 // pred_check_branch
          %1571 = sbr.rel (%p1569) target = $region124
        $region123: #{fused_extract.1} parent=83 // pred_region
          %1572 = dma.done [#allocation10], 64
        $region124: #{fused_extract.1} parent=83 // pred_fallthru
          _
      $region84: #{fused_extract.1} parent=5 // pred_fallthru
        _
      %p1573 = scmp.le.s32.totalorder 2, %s29
      // Predicated region
      $region125: #{fused_extract.1} parent=5 // pred_check
        %p1574 = pneg %p1573
      $region126: #{fused_extract.1} parent=5 // pred_check_branch
        %1576 = sbr.rel (%p1574) target = $region128
      $region127: #{fused_extract.1} parent=5 // pred_region
        %s1577 = ssub.s32 %s29, 2
      $region128: #{fused_extract.1} parent=5 // pred_fallthru
        _
    $region6: #{fused_extract.1} parent=1 // loop_footer
      %s33 = sadd.s32 1, %s29
    $region7: #{fused_extract.1} parent=1 // loop_footer_branch
      %28 = sbr.rel target = $region3
    $region8: #{fused_extract.1} parent=1 // loop_exit
      _
    %1578 = vsyncpa [#allocation9], 1
    %s1579 = scalar_lea.sflag [#allocation9], 1
    %1580 = vsyncpa %s1579, 1
    %1581 = vsyncpa [#allocation12], 1
    %1582 = vsyncpa [#allocation15], 1
    %1583 = vsyncpa [#allocation18], 1
    %1584 = vsyncpa [#allocation10], 1
    %s1585 = scalar_lea.sflag [#allocation10], 1
    %1586 = vsyncpa %s1585, 1

</llo_original>
